<compile_context>
chip_gen: v5e
topology: v5e:2x2
jax: 0.10.0
libtpu: 0.0.40
codegen_flags: <defaults>
</compile_context>

<pallas_src>
import jax
import jax.numpy as jnp
from jax.experimental import pallas as pl
from jax.experimental.pallas import tpu as pltpu

# ---- ListeNet default hyperparameters (from the PyTorch __init__) ----
IN_CHANNELS = 10
K_CONV = 5
K_MP = 5
FC_NEURONS = 500               # pooled length must equal this for fc1
FC1_OUT = FC_NEURONS // 4      # 125
FC2_OUT = FC_NEURONS // 16     # 31
BATCH = 2
WIN = K_CONV + K_MP - 1        # 9 input samples feed one pooled output
CW = IN_CHANNELS * WIN         # 90 contraction dim, ordered (channel, tap)
CW1 = CW + 1                   # +1 ones-row that carries the conv bias
SEQ_LEN = FC_NEURONS * K_MP + K_CONV - 1   # 2504 -> conv out 2500 -> pool out 500


def listenet_kernel(xw_ref, wt_ref, w1_ref, b1_ref, w2_ref, b2_ref, out_ref):
    """Single grid step processing the whole (tiny) batch.
    xw_ref: (N, CW1, P) f32  pool-window im2col + ones row, contraction on sublanes
    wt_ref: (K_MP, CW1) f32  Toeplitz conv weight, last column = conv bias
    w1_ref: (FC_NEURONS, FC1_OUT); b1_ref: (1, FC1_OUT)
    w2_ref: (FC1_OUT, FC2_OUT);    b2_ref: (1, FC2_OUT)
    out_ref: (N, FC2_OUT)
    """
    n = xw_ref.shape[0]
    wt = wt_ref[...]                                            # (K_MP, CW1)
    rows = []
    for b in range(n):                                          # static unroll, N == 2
        # conv1d at the K_MP pool offsets for all P pooled positions: one MXU matmul
        # (contraction over channel*tap + bias = 91).
        z = jnp.dot(wt, xw_ref[b], preferred_element_type=jnp.float32)   # (K_MP, P)
        z = jnp.maximum(z, 0.0)                                 # relu(conv(x) + bias)
        # maxpool over the K_MP offsets: one <=8-sublane max.  The post-pool relu of
        # the PyTorch model is idempotent here (inputs are already >= 0).
        rows.append(jnp.max(z, axis=0, keepdims=True))          # (1, P)
    pooled = jnp.concatenate(rows, axis=0)                      # (N, P)

    # fc1 -> relu -> fc2 -> relu as real GEMMs with M = N sublanes.
    h1 = jnp.dot(pooled, w1_ref[...], preferred_element_type=jnp.float32) + b1_ref[...]
    h1 = jnp.maximum(h1, 0.0)
    h2 = jnp.dot(h1, w2_ref[...], preferred_element_type=jnp.float32) + b2_ref[...]
    h2 = jnp.maximum(h2, 0.0)

    # TODO(synk): PyTorch builds nn.Softmax(dim=num_classes)=Softmax(dim=10), which is
    # out of range for the rank-3 activation (would raise at runtime); implemented as a
    # numerically-stable softmax over the last (class) axis, matching the JAX reference.
    m = jnp.max(h2, axis=-1, keepdims=True)
    e = jnp.exp(h2 - m)
    s = jnp.sum(e, axis=-1, keepdims=True)
    inv = pl.reciprocal(s, approx=True)          # EUP reciprocal (free slot)
    inv = inv * (2.0 - s * inv)                  # one Newton step -> f32-accurate
    out_ref[...] = e * inv


def _toeplitz_conv_weight(wc, bc):
    """wt[j, c*WIN + i] = wc[c, i-j] for 0 <= i-j < K_CONV else 0; wt[:, CW] = bc."""
    j = jnp.arange(K_MP)[:, None]                     # (K_MP, 1)
    i = jnp.arange(WIN)[None, :]                      # (1, WIN)
    k = i - j                                         # (K_MP, WIN)
    valid = (k >= 0) & (k < K_CONV)
    taps = wc[:, jnp.clip(k, 0, K_CONV - 1)]          # (C, K_MP, WIN)
    taps = jnp.where(valid[None, :, :], taps, 0.0)
    core = jnp.transpose(taps, (1, 0, 2)).reshape(K_MP, CW)        # (K_MP, 90)
    bias_col = jnp.broadcast_to(bc.reshape(1, 1), (K_MP, 1))       # conv bias column
    return jnp.concatenate([core, bias_col], axis=1)               # (K_MP, 91)


def init_params(key):
    """Deterministic PyTorch-style uniform(-1/sqrt(fan_in), 1/sqrt(fan_in)) init."""
    ks = jax.random.split(key, 6)
    bc_bound = 1.0 / (IN_CHANNELS * K_CONV) ** 0.5
    wc = jax.random.uniform(ks[0], (IN_CHANNELS, K_CONV), jnp.float32, -bc_bound, bc_bound)
    bc = jax.random.uniform(ks[1], (1,), jnp.float32, -bc_bound, bc_bound)
    b1_bound = 1.0 / FC_NEURONS ** 0.5
    w1 = jax.random.uniform(ks[2], (FC_NEURONS, FC1_OUT), jnp.float32, -b1_bound, b1_bound)
    b1 = jax.random.uniform(ks[3], (1, FC1_OUT), jnp.float32, -b1_bound, b1_bound)
    b2_bound = 1.0 / FC1_OUT ** 0.5
    w2 = jax.random.uniform(ks[4], (FC1_OUT, FC2_OUT), jnp.float32, -b2_bound, b2_bound)
    b2 = jax.random.uniform(ks[5], (1, FC2_OUT), jnp.float32, -b2_bound, b2_bound)
    return wc, bc, w1, b1, w2, b2


def listenet_forward(x, params):
    """x: (N, C, L) NCL float32 -> (N, 1, FC2_OUT), matching the PyTorch module."""
    wc, bc, w1, b1, w2, b2 = params
    n, c, L = x.shape
    p = (L - K_CONV + 1) // K_MP
    assert p == FC_NEURONS and c == IN_CHANNELS, "shapes must match module defaults"

    # Pool-window im2col built from strided basic slices -- NO gather.
    # Column i holds x[:, :, K_MP*q + i] for q in [0, P); contraction index = c*WIN + i.
    cols = [x[:, :, i::K_MP][:, :, :p] for i in range(WIN)]        # 9 x (N, C, P)
    xw = jnp.stack(cols, axis=2).reshape(n, CW, p)                 # (N, 90, P)
    ones = jnp.ones((n, 1, p), x.dtype)                            # feeds the bias column
    xw = jnp.concatenate([xw, ones], axis=1)                       # (N, 91, P)
    wt = _toeplitz_conv_weight(wc, bc)                             # (K_MP, 91), tiny

    out = pl.pallas_call(
        listenet_kernel,
        out_shape=jax.ShapeDtypeStruct((n, FC2_OUT), jnp.float32),
        grid=(1,),   # single step: whole batch; every weight DMA'd exactly once
        in_specs=[
            pl.BlockSpec((n, CW1, p), lambda _: (0, 0, 0)),
            pl.BlockSpec((K_MP, CW1), lambda _: (0, 0)),
            pl.BlockSpec((FC_NEURONS, FC1_OUT), lambda _: (0, 0)),
            pl.BlockSpec((1, FC1_OUT), lambda _: (0, 0)),
            pl.BlockSpec((FC1_OUT, FC2_OUT), lambda _: (0, 0)),
            pl.BlockSpec((1, FC2_OUT), lambda _: (0, 0)),
        ],
        out_specs=pl.BlockSpec((n, FC2_OUT), lambda _: (0, 0)),
        compiler_params=pltpu.CompilerParams(
            dimension_semantics=("arbitrary",),
            # one flag per operand: allow XLA to fuse the slice/stack im2col producer
            # (operand 0) into the pallas_call input instead of a standalone fusion.
            allow_input_fusion=[True, False, False, False, False, False],
        ),
    )(xw, wt, w1, b1, w2, b2)
    # Unit-dim insertion is a free bitcast inside the same jit (no extra kernel).
    return out[:, None, :]


def listenet_reference(x, params):
    """Pure-JAX reference mirroring the PyTorch forward (softmax on last axis)."""
    wc, bc, w1, b1, w2, b2 = params
    conv = jax.lax.conv_general_dilated(
        x, wc[None, :, :], window_strides=(1,), padding="VALID",
        dimension_numbers=("NCH", "OIH", "NCH"))[:, 0, :] + bc[0]
    conv = jnp.maximum(conv, 0.0)
    p = conv.shape[-1] // K_MP
    pooled = jnp.max(conv[:, : p * K_MP].reshape(x.shape[0], p, K_MP), axis=-1)
    pooled = jnp.maximum(pooled, 0.0)
    h1 = jnp.maximum(pooled @ w1 + b1, 0.0)
    h2 = jnp.maximum(h1 @ w2 + b2, 0.0)
    return jax.nn.softmax(h2, axis=-1).reshape(x.shape[0], 1, -1)


if __name__ == "__main__":
    key = jax.random.PRNGKey(0)
    k_x, k_p = jax.random.split(key)
    x = jax.random.normal(k_x, (BATCH, IN_CHANNELS, SEQ_LEN), dtype=jnp.float32)
    params = init_params(k_p)

    fwd = jax.jit(listenet_forward)
    out = jax.block_until_ready(fwd(x, params))
    ref = jax.block_until_ready(listenet_reference(x, params))

    assert out.shape == (BATCH, 1, FC2_OUT), out.shape
    assert jnp.allclose(jnp.sum(out, axis=-1), 1.0, atol=1e-4)
    assert jnp.allclose(out, ref, rtol=1e-4, atol=1e-5)
    print("KERNEL_OK")
</pallas_src>

<mosaic_0001>
module attributes {stable_mosaic.version = 11 : i64} {
  func.func @listenet_kernel(%arg0: i32, %arg1: memref<2x91x500xf32, #tpu.memory_space<vmem>>, %arg2: memref<5x91xf32, #tpu.memory_space<vmem>>, %arg3: memref<500x125xf32, #tpu.memory_space<vmem>>, %arg4: memref<1x125xf32, #tpu.memory_space<vmem>>, %arg5: memref<125x31xf32, #tpu.memory_space<vmem>>, %arg6: memref<1x31xf32, #tpu.memory_space<vmem>>, %arg7: memref<2x31xf32, #tpu.memory_space<vmem>>) attributes {dimension_semantics = [#tpu.dimension_semantics<arbitrary>], iteration_bounds = array<i64: 1>, scalar_prefetch = 0 : i64, scratch_operands = 0 : i64, tpu.core_type = #tpu.core_type<tc>, window_params = [{pipeline_mode = #tpu.pipeline_mode<synchronous>, transform_indices = @transform_0, window_bounds = array<i64: 2, 91, 500>}, {pipeline_mode = #tpu.pipeline_mode<synchronous>, transform_indices = @transform_1, window_bounds = array<i64: 5, 91>}, {pipeline_mode = #tpu.pipeline_mode<synchronous>, transform_indices = @transform_2, window_bounds = array<i64: 500, 125>}, {pipeline_mode = #tpu.pipeline_mode<synchronous>, transform_indices = @transform_3, window_bounds = array<i64: 1, 125>}, {pipeline_mode = #tpu.pipeline_mode<synchronous>, transform_indices = @transform_4, window_bounds = array<i64: 125, 31>}, {pipeline_mode = #tpu.pipeline_mode<synchronous>, transform_indices = @transform_5, window_bounds = array<i64: 1, 31>}, {pipeline_mode = #tpu.pipeline_mode<synchronous>, transform_indices = @transform_6, window_bounds = array<i64: 2, 31>}]} {
    %c0 = arith.constant 0 : index
    %c0_0 = arith.constant 0 : index
    %0 = vector.load %arg2[%c0, %c0_0] : memref<5x91xf32, #tpu.memory_space<vmem>>, vector<5x91xf32>
    %c0_1 = arith.constant 0 : index
    %c0_2 = arith.constant 0 : index
    %c0_3 = arith.constant 0 : index
    %1 = vector.load %arg1[%c0_1, %c0_2, %c0_3] : memref<2x91x500xf32, #tpu.memory_space<vmem>>, vector<1x91x500xf32>
    %2 = vector.shape_cast %1 : vector<1x91x500xf32> to vector<91x500xf32>
    %cst = arith.constant dense<0.000000e+00> : vector<5x500xf32>
    %3 = tpu.matmul %0, %2, %cst {dimension_numbers = #tpu.dot_dimension_numbers<[1], [0], [0], [1], [0, 0, 1, 1], [], []>} : vector<5x91xf32>, vector<91x500xf32>, vector<5x500xf32> -> vector<5x500xf32>
    %cst_4 = arith.constant 0.000000e+00 : f32
    %4 = vector.broadcast %cst_4 : f32 to vector<5x500xf32>
    %5 = arith.maximumf %3, %4 : vector<5x500xf32>
    %cst_5 = arith.constant dense<0xFF800000> : vector<500xf32>
    %6 = vector.multi_reduction <maximumf>, %5, %cst_5 [0] : vector<5x500xf32> to vector<500xf32>
    %7 = vector.shape_cast %6 : vector<500xf32> to vector<1x500xf32>
    %c1 = arith.constant 1 : index
    %c0_6 = arith.constant 0 : index
    %c0_7 = arith.constant 0 : index
    %8 = vector.load %arg1[%c1, %c0_6, %c0_7] : memref<2x91x500xf32, #tpu.memory_space<vmem>>, vector<1x91x500xf32>
    %9 = vector.shape_cast %8 : vector<1x91x500xf32> to vector<91x500xf32>
    %cst_8 = arith.constant dense<0.000000e+00> : vector<5x500xf32>
    %10 = tpu.matmul %0, %9, %cst_8 {dimension_numbers = #tpu.dot_dimension_numbers<[1], [0], [0], [1], [0, 0, 1, 1], [], []>} : vector<5x91xf32>, vector<91x500xf32>, vector<5x500xf32> -> vector<5x500xf32>
    %cst_9 = arith.constant 0.000000e+00 : f32
    %11 = vector.broadcast %cst_9 : f32 to vector<5x500xf32>
    %12 = arith.maximumf %10, %11 : vector<5x500xf32>
    %cst_10 = arith.constant dense<0xFF800000> : vector<500xf32>
    %13 = vector.multi_reduction <maximumf>, %12, %cst_10 [0] : vector<5x500xf32> to vector<500xf32>
    %14 = vector.shape_cast %13 : vector<500xf32> to vector<1x500xf32>
    %15 = tpu.concatenate %7, %14 in 0 : vector<1x500xf32>, vector<1x500xf32> -> vector<2x500xf32>
    %c0_11 = arith.constant 0 : index
    %c0_12 = arith.constant 0 : index
    %16 = vector.load %arg3[%c0_11, %c0_12] : memref<500x125xf32, #tpu.memory_space<vmem>>, vector<500x125xf32>
    %cst_13 = arith.constant dense<0.000000e+00> : vector<2x125xf32>
    %17 = tpu.matmul %15, %16, %cst_13 {dimension_numbers = #tpu.dot_dimension_numbers<[1], [0], [0], [1], [0, 0, 1, 1], [], []>} : vector<2x500xf32>, vector<500x125xf32>, vector<2x125xf32> -> vector<2x125xf32>
    %c0_14 = arith.constant 0 : index
    %c0_15 = arith.constant 0 : index
    %18 = vector.load %arg4[%c0_14, %c0_15] : memref<1x125xf32, #tpu.memory_space<vmem>>, vector<1x125xf32>
    %19 = vector.broadcast %18 : vector<1x125xf32> to vector<2x125xf32>
    %20 = arith.addf %17, %19 : vector<2x125xf32>
    %cst_16 = arith.constant 0.000000e+00 : f32
    %21 = vector.broadcast %cst_16 : f32 to vector<2x125xf32>
    %22 = arith.maximumf %20, %21 : vector<2x125xf32>
    %c0_17 = arith.constant 0 : index
    %c0_18 = arith.constant 0 : index
    %23 = vector.load %arg5[%c0_17, %c0_18] : memref<125x31xf32, #tpu.memory_space<vmem>>, vector<125x31xf32>
    %cst_19 = arith.constant dense<0.000000e+00> : vector<2x31xf32>
    %24 = tpu.matmul %22, %23, %cst_19 {dimension_numbers = #tpu.dot_dimension_numbers<[1], [0], [0], [1], [0, 0, 1, 1], [], []>} : vector<2x125xf32>, vector<125x31xf32>, vector<2x31xf32> -> vector<2x31xf32>
    %c0_20 = arith.constant 0 : index
    %c0_21 = arith.constant 0 : index
    %25 = vector.load %arg6[%c0_20, %c0_21] : memref<1x31xf32, #tpu.memory_space<vmem>>, vector<1x31xf32>
    %26 = vector.broadcast %25 : vector<1x31xf32> to vector<2x31xf32>
    %27 = arith.addf %24, %26 : vector<2x31xf32>
    %cst_22 = arith.constant 0.000000e+00 : f32
    %28 = vector.broadcast %cst_22 : f32 to vector<2x31xf32>
    %29 = arith.maximumf %27, %28 : vector<2x31xf32>
    %cst_23 = arith.constant dense<0xFF800000> : vector<2xf32>
    %30 = vector.multi_reduction <maximumf>, %29, %cst_23 [1] : vector<2x31xf32> to vector<2xf32>
    %31 = vector.shape_cast %30 : vector<2xf32> to vector<2x1xf32>
    %32 = vector.broadcast %31 : vector<2x1xf32> to vector<2x31xf32>
    %33 = arith.subf %29, %32 : vector<2x31xf32>
    %34 = math.exp %33 : vector<2x31xf32>
    %cst_24 = arith.constant dense<0.000000e+00> : vector<2xf32>
    %35 = vector.multi_reduction <add>, %34, %cst_24 [1] : vector<2x31xf32> to vector<2xf32>
    %36 = vector.shape_cast %35 : vector<2xf32> to vector<2x1xf32>
    %37 = tpu.reciprocal %36 {approx = true} : vector<2x1xf32> -> vector<2x1xf32>
    %38 = arith.mulf %36, %37 : vector<2x1xf32>
    %cst_25 = arith.constant 2.000000e+00 : f32
    %39 = vector.broadcast %cst_25 : f32 to vector<2x1xf32>
    %40 = arith.subf %39, %38 : vector<2x1xf32>
    %41 = arith.mulf %37, %40 : vector<2x1xf32>
    %42 = vector.broadcast %41 : vector<2x1xf32> to vector<2x31xf32>
    %43 = arith.mulf %34, %42 : vector<2x31xf32>
    %c0_26 = arith.constant 0 : index
    %c0_27 = arith.constant 0 : index
    %44 = vector.load %arg7[%c0_26, %c0_27] : memref<2x31xf32, #tpu.memory_space<vmem>>, vector<2x31xf32>
    tpu.vector_store %arg7[%c0_26, %c0_27], %43 {strides = array<i32>} : memref<2x31xf32, #tpu.memory_space<vmem>>, vector<2x31xf32>,
    return
  }
  func.func @transform_0(%arg0: i32) -> (i32, i32, i32) {
    %c0_i32 = arith.constant 0 : i32
    %c0_i32_0 = arith.constant 0 : i32
    %c0_i32_1 = arith.constant 0 : i32
    %c0_i32_2 = arith.constant 0 : i32
    return %c0_i32, %c0_i32_0, %c0_i32_1 : i32, i32, i32
  }
  func.func @transform_1(%arg0: i32) -> (i32, i32) {
    %c0_i32 = arith.constant 0 : i32
    %c0_i32_0 = arith.constant 0 : i32
    %c0_i32_1 = arith.constant 0 : i32
    return %c0_i32, %c0_i32_0 : i32, i32
  }
  func.func @transform_2(%arg0: i32) -> (i32, i32) {
    %c0_i32 = arith.constant 0 : i32
    %c0_i32_0 = arith.constant 0 : i32
    %c0_i32_1 = arith.constant 0 : i32
    return %c0_i32, %c0_i32_0 : i32, i32
  }
  func.func @transform_3(%arg0: i32) -> (i32, i32) {
    %c0_i32 = arith.constant 0 : i32
    %c0_i32_0 = arith.constant 0 : i32
    %c0_i32_1 = arith.constant 0 : i32
    return %c0_i32, %c0_i32_0 : i32, i32
  }
  func.func @transform_4(%arg0: i32) -> (i32, i32) {
    %c0_i32 = arith.constant 0 : i32
    %c0_i32_0 = arith.constant 0 : i32
    %c0_i32_1 = arith.constant 0 : i32
    return %c0_i32, %c0_i32_0 : i32, i32
  }
  func.func @transform_5(%arg0: i32) -> (i32, i32) {
    %c0_i32 = arith.constant 0 : i32
    %c0_i32_0 = arith.constant 0 : i32
    %c0_i32_1 = arith.constant 0 : i32
    return %c0_i32, %c0_i32_0 : i32, i32
  }
  func.func @transform_6(%arg0: i32) -> (i32, i32) {
    %c0_i32 = arith.constant 0 : i32
    %c0_i32_0 = arith.constant 0 : i32
    %c0_i32_1 = arith.constant 0 : i32
    return %c0_i32, %c0_i32_0 : i32, i32
  }
}

</mosaic_0001>

<llo_original>
// kernel: listenet_forward.2
$region0: #{listenet_forward.2}
  #allocation0 [shape = 'u32[]', space=smem, size = 0x4, offset = 0x4, fixed_abs, tag = 'smem constant byte address 0x4 - core index']
  #allocation1 [shape = 'u32[72,128]{1,0:T(1,128)}', space=vmem, size = 0x9000, scoped, tag = 'internal scratch']
  #allocation2 [shape = 'u32[2048]{0}', space=vmem, size = 0x2000, scoped, tag = 'scoped memory for listenet_forward.2']
  #allocation3 [shape = 'u32[2048]{0}', space=vmem, size = 0x2000, scoped, tag = 'scoped memory for listenet_forward.2']
  #allocation4 [shape = 'u32[2048]{0}', space=vmem, size = 0x2000, scoped, tag = 'scoped memory for listenet_forward.2']
  #allocation5 [shape = 'u32[2048]{0}', space=vmem, size = 0x2000, scoped, tag = 'scoped memory for listenet_forward.2']
  #allocation6 [shape = 'u32[2048]{0}', space=vmem, size = 0x2000, scoped, tag = 'scoped memory for listenet_forward.2']
  %s0 = inlined_call_operand.vmem [shape: f32[5,91], index: 0, kind: input, shape index: {}]
  %s1 = inlined_call_operand.vmem [shape: f32[500,125], index: 1, kind: input, shape index: {}]
  %s2 = inlined_call_operand.vmem [shape: f32[1,125], index: 2, kind: input, shape index: {}]
  %s3 = inlined_call_operand.vmem [shape: f32[125,31], index: 3, kind: input, shape index: {}]
  %s4 = inlined_call_operand.vmem [shape: f32[1,31], index: 4, kind: input, shape index: {}]
  %s5 = inlined_call_operand.vmem [shape: f32[2,90,500], index: 5, kind: input, shape index: {}]
  %s6 = inlined_call_operand.<no memory space> [shape: f32[], index: 6, kind: input, shape index: {}]
  %s7 = inlined_call_operand.hbm [shape: f32[2,31], index: 7, kind: output, shape index: {}]
  %s8 = sld [smem:[#allocation0]]
  $region34: #{listenet_forward.2} parent=0
    _
  %s10 = ssub.s32 1, %s8
  %s11 = scalar_select 0, %s10, %s8
  %v12 = vstv %s6
  $region1: #{listenet_forward.2} parent=0
    #allocation7 [shape = 'u8[1024]{0}', space=vmem, size = 0x400, scoped, tag = 'output window, operand 0, single buffered']
    #allocation8 [shape = 's32[1]{0}', space=sflag, size = 0x4, scoped, tag = 'scoped memory for listenet_forward.2']
    #allocation9 [shape = 'u8[393216]{0}', space=vmem, size = 0x60000, dematerialized = true, scoped, tag = 'FusionAdapter Buffer %fusion.1 = f32[2,91,500]{2,1,0:T(8,128)} fusion(%param_5.1, %param_6), kind=kLoop, calls=%fused_computation.2.clone, metadata={op_name="jit(listenet_forward)/concatenate" stack_frame_id=10}']
    %13 = vsyncpa [#allocation8], 0
    // Predicated region
    $region2: #{listenet_forward.2} parent=1 // pred_check
      _
    $region3: #{listenet_forward.2} parent=1 // pred_check_branch
      %15 = sbr.rel (0) target = $region5
    $region4: #{listenet_forward.2} parent=1 // pred_region
      _
    $region5: #{listenet_forward.2} parent=1 // pred_fallthru
      _
    // Predicated region
    $region6: #{listenet_forward.2} parent=1 // pred_check
      _
    $region7: #{listenet_forward.2} parent=1 // pred_check_branch
      %17 = sbr.rel (0) target = $region9
    $region8: #{listenet_forward.2} parent=1 // pred_region
      _
    $region9: #{listenet_forward.2} parent=1 // pred_fallthru
      _
    // Predicated region
    $region10: #{listenet_forward.2} parent=1 // pred_check
      _
    $region11: #{listenet_forward.2} parent=1 // pred_check_branch
      %19 = sbr.rel (0) target = $region13
    $region12: #{listenet_forward.2} parent=1 // pred_region
      _
    $region13: #{listenet_forward.2} parent=1 // pred_fallthru
      _
    // Predicated region
    $region14: #{listenet_forward.2} parent=1 // pred_check
      _
    $region15: #{listenet_forward.2} parent=1 // pred_check_branch
      %21 = sbr.rel (0) target = $region17
    $region16: #{listenet_forward.2} parent=1 // pred_region
      _
    $region17: #{listenet_forward.2} parent=1 // pred_fallthru
      _
    // Predicated region
    $region18: #{listenet_forward.2} parent=1 // pred_check
      _
    $region19: #{listenet_forward.2} parent=1 // pred_check_branch
      %23 = sbr.rel (0) target = $region21
    $region20: #{listenet_forward.2} parent=1 // pred_region
      _
    $region21: #{listenet_forward.2} parent=1 // pred_fallthru
      _
    // Predicated region
    $region22: #{listenet_forward.2} parent=1 // pred_check
      _
    $region23: #{listenet_forward.2} parent=1 // pred_check_branch
      %25 = sbr.rel (0) target = $region25
    $region24: #{listenet_forward.2} parent=1 // pred_region
      _
    $region25: #{listenet_forward.2} parent=1 // pred_fallthru
      _
    %v26 = vld [vmem:[%s5] sm:$0xff]
    %v27 = vlaneseq
    %v28 = vshrl.u32 %v27, 7
    %vm30 = vcmp.lt.s32.totalorder %v28, 90
    %v31 = vsel %vm30, %v26, %v12
    %v32 = vlaneseq
    %v33 = vand.u32 %v32, 127
    %vm35 = vcmp.lt.s32.totalorder %v33, 500
    %v36 = vsel %vm35, %v31, %v12
    %s38 = ssub.s32 256, 1
    %39 = vst [vmem:[#allocation9] sm:%s38] %v36
    %s40 = scalar_lea.vmem %s5, 8
    %v41 = vld [vmem:[%s40] sm:$0xff]
    %v42 = vlaneseq
    %v43 = vshrl.u32 %v42, 7
    %vm45 = vcmp.lt.s32.totalorder %v43, 90
    %v46 = vsel %vm45, %v41, %v12
    %v47 = vlaneseq
    %v48 = vand.u32 %v47, 127
    %v49 = vadd.s32 %v48, 128
    %vm50 = vcmp.lt.s32.totalorder %v49, 500
    %v51 = vsel %vm50, %v46, %v12
    %s52 = scalar_lea.vmem [#allocation9], 8
    %s54 = ssub.s32 256, 1
    %55 = vst [vmem:[%s52] sm:%s54] %v51
    %s56 = scalar_lea.vmem %s5, 16
    %v57 = vld [vmem:[%s56] sm:$0xff]
    %v58 = vlaneseq
    %v59 = vshrl.u32 %v58, 7
    %vm61 = vcmp.lt.s32.totalorder %v59, 90
    %v62 = vsel %vm61, %v57, %v12
    %v63 = vlaneseq
    %v64 = vand.u32 %v63, 127
    %v65 = vadd.s32 %v64, 256
    %vm66 = vcmp.lt.s32.totalorder %v65, 500
    %v67 = vsel %vm66, %v62, %v12
    %s68 = scalar_lea.vmem [#allocation9], 16
    %s70 = ssub.s32 256, 1
    %71 = vst [vmem:[%s68] sm:%s70] %v67
    %s72 = scalar_lea.vmem %s5, 24
    %v73 = vld [vmem:[%s72] sm:$0xff]
    %v74 = vlaneseq
    %v75 = vshrl.u32 %v74, 7
    %vm77 = vcmp.lt.s32.totalorder %v75, 90
    %v78 = vsel %vm77, %v73, %v12
    %v79 = vlaneseq
    %v80 = vand.u32 %v79, 127
    %v81 = vadd.s32 %v80, 384
    %vm82 = vcmp.lt.s32.totalorder %v81, 500
    %v83 = vsel %vm82, %v78, %v12
    %s84 = scalar_lea.vmem [#allocation9], 24
    %s86 = ssub.s32 256, 1
    %87 = vst [vmem:[%s84] sm:%s86] %v83
    %s88 = scalar_lea.vmem %s5, 32
    %v89 = vld [vmem:[%s88] sm:$0xff]
    %v90 = vlaneseq
    %v91 = vshrl.u32 %v90, 7
    %v92 = vadd.s32 %v91, 8
    %vm93 = vcmp.lt.s32.totalorder %v92, 90
    %v94 = vsel %vm93, %v89, %v12
    %v95 = vlaneseq
    %v96 = vand.u32 %v95, 127
    %vm98 = vcmp.lt.s32.totalorder %v96, 500
    %v99 = vsel %vm98, %v94, %v12
    %s100 = scalar_lea.vmem [#allocation9], 32
    %s102 = ssub.s32 256, 1
    %103 = vst [vmem:[%s100] sm:%s102] %v99
    %s104 = scalar_lea.vmem %s5, 40
    %v105 = vld [vmem:[%s104] sm:$0xff]
    %v106 = vlaneseq
    %v107 = vshrl.u32 %v106, 7
    %v108 = vadd.s32 %v107, 8
    %vm109 = vcmp.lt.s32.totalorder %v108, 90
    %v110 = vsel %vm109, %v105, %v12
    %v111 = vlaneseq
    %v112 = vand.u32 %v111, 127
    %v113 = vadd.s32 %v112, 128
    %vm114 = vcmp.lt.s32.totalorder %v113, 500
    %v115 = vsel %vm114, %v110, %v12
    %s116 = scalar_lea.vmem [#allocation9], 40
    %s118 = ssub.s32 256, 1
    %119 = vst [vmem:[%s116] sm:%s118] %v115
    %s120 = scalar_lea.vmem %s5, 48
    %v121 = vld [vmem:[%s120] sm:$0xff]
    %v122 = vlaneseq
    %v123 = vshrl.u32 %v122, 7
    %v124 = vadd.s32 %v123, 8
    %vm125 = vcmp.lt.s32.totalorder %v124, 90
    %v126 = vsel %vm125, %v121, %v12
    %v127 = vlaneseq
    %v128 = vand.u32 %v127, 127
    %v129 = vadd.s32 %v128, 256
    %vm130 = vcmp.lt.s32.totalorder %v129, 500
    %v131 = vsel %vm130, %v126, %v12
    %s132 = scalar_lea.vmem [#allocation9], 48
    %s134 = ssub.s32 256, 1
    %135 = vst [vmem:[%s132] sm:%s134] %v131
    %s136 = scalar_lea.vmem %s5, 56
    %v137 = vld [vmem:[%s136] sm:$0xff]
    %v138 = vlaneseq
    %v139 = vshrl.u32 %v138, 7
    %v140 = vadd.s32 %v139, 8
    %vm141 = vcmp.lt.s32.totalorder %v140, 90
    %v142 = vsel %vm141, %v137, %v12
    %v143 = vlaneseq
    %v144 = vand.u32 %v143, 127
    %v145 = vadd.s32 %v144, 384
    %vm146 = vcmp.lt.s32.totalorder %v145, 500
    %v147 = vsel %vm146, %v142, %v12
    %s148 = scalar_lea.vmem [#allocation9], 56
    %s150 = ssub.s32 256, 1
    %151 = vst [vmem:[%s148] sm:%s150] %v147
    %s152 = scalar_lea.vmem %s5, 64
    %v153 = vld [vmem:[%s152] sm:$0xff]
    %v154 = vlaneseq
    %v155 = vshrl.u32 %v154, 7
    %v156 = vadd.s32 %v155, 16
    %vm157 = vcmp.lt.s32.totalorder %v156, 90
    %v158 = vsel %vm157, %v153, %v12
    %v159 = vlaneseq
    %v160 = vand.u32 %v159, 127
    %vm162 = vcmp.lt.s32.totalorder %v160, 500
    %v163 = vsel %vm162, %v158, %v12
    %s164 = scalar_lea.vmem [#allocation9], 64
    %s166 = ssub.s32 256, 1
    %167 = vst [vmem:[%s164] sm:%s166] %v163
    %s168 = scalar_lea.vmem %s5, 72
    %v169 = vld [vmem:[%s168] sm:$0xff]
    %v170 = vlaneseq
    %v171 = vshrl.u32 %v170, 7
    %v172 = vadd.s32 %v171, 16
    %vm173 = vcmp.lt.s32.totalorder %v172, 90
    %v174 = vsel %vm173, %v169, %v12
    %v175 = vlaneseq
    %v176 = vand.u32 %v175, 127
    %v177 = vadd.s32 %v176, 128
    %vm178 = vcmp.lt.s32.totalorder %v177, 500
    %v179 = vsel %vm178, %v174, %v12
    %s180 = scalar_lea.vmem [#allocation9], 72
    %s182 = ssub.s32 256, 1
    %183 = vst [vmem:[%s180] sm:%s182] %v179
    %s184 = scalar_lea.vmem %s5, 80
    %v185 = vld [vmem:[%s184] sm:$0xff]
    %v186 = vlaneseq
    %v187 = vshrl.u32 %v186, 7
    %v188 = vadd.s32 %v187, 16
    %vm189 = vcmp.lt.s32.totalorder %v188, 90
    %v190 = vsel %vm189, %v185, %v12
    %v191 = vlaneseq
    %v192 = vand.u32 %v191, 127
    %v193 = vadd.s32 %v192, 256
    %vm194 = vcmp.lt.s32.totalorder %v193, 500
    %v195 = vsel %vm194, %v190, %v12
    %s196 = scalar_lea.vmem [#allocation9], 80
    %s198 = ssub.s32 256, 1
    %199 = vst [vmem:[%s196] sm:%s198] %v195
    %s200 = scalar_lea.vmem %s5, 88
    %v201 = vld [vmem:[%s200] sm:$0xff]
    %v202 = vlaneseq
    %v203 = vshrl.u32 %v202, 7
    %v204 = vadd.s32 %v203, 16
    %vm205 = vcmp.lt.s32.totalorder %v204, 90
    %v206 = vsel %vm205, %v201, %v12
    %v207 = vlaneseq
    %v208 = vand.u32 %v207, 127
    %v209 = vadd.s32 %v208, 384
    %vm210 = vcmp.lt.s32.totalorder %v209, 500
    %v211 = vsel %vm210, %v206, %v12
    %s212 = scalar_lea.vmem [#allocation9], 88
    %s214 = ssub.s32 256, 1
    %215 = vst [vmem:[%s212] sm:%s214] %v211
    %s216 = scalar_lea.vmem %s5, 96
    %v217 = vld [vmem:[%s216] sm:$0xff]
    %v218 = vlaneseq
    %v219 = vshrl.u32 %v218, 7
    %v220 = vadd.s32 %v219, 24
    %vm221 = vcmp.lt.s32.totalorder %v220, 90
    %v222 = vsel %vm221, %v217, %v12
    %v223 = vlaneseq
    %v224 = vand.u32 %v223, 127
    %vm226 = vcmp.lt.s32.totalorder %v224, 500
    %v227 = vsel %vm226, %v222, %v12
    %s228 = scalar_lea.vmem [#allocation9], 96
    %s230 = ssub.s32 256, 1
    %231 = vst [vmem:[%s228] sm:%s230] %v227
    %s232 = scalar_lea.vmem %s5, 104
    %v233 = vld [vmem:[%s232] sm:$0xff]
    %v234 = vlaneseq
    %v235 = vshrl.u32 %v234, 7
    %v236 = vadd.s32 %v235, 24
    %vm237 = vcmp.lt.s32.totalorder %v236, 90
    %v238 = vsel %vm237, %v233, %v12
    %v239 = vlaneseq
    %v240 = vand.u32 %v239, 127
    %v241 = vadd.s32 %v240, 128
    %vm242 = vcmp.lt.s32.totalorder %v241, 500
    %v243 = vsel %vm242, %v238, %v12
    %s244 = scalar_lea.vmem [#allocation9], 104
    %s246 = ssub.s32 256, 1
    %247 = vst [vmem:[%s244] sm:%s246] %v243
    %s248 = scalar_lea.vmem %s5, 112
    %v249 = vld [vmem:[%s248] sm:$0xff]
    %v250 = vlaneseq
    %v251 = vshrl.u32 %v250, 7
    %v252 = vadd.s32 %v251, 24
    %vm253 = vcmp.lt.s32.totalorder %v252, 90
    %v254 = vsel %vm253, %v249, %v12
    %v255 = vlaneseq
    %v256 = vand.u32 %v255, 127
    %v257 = vadd.s32 %v256, 256
    %vm258 = vcmp.lt.s32.totalorder %v257, 500
    %v259 = vsel %vm258, %v254, %v12
    %s260 = scalar_lea.vmem [#allocation9], 112
    %s262 = ssub.s32 256, 1
    %263 = vst [vmem:[%s260] sm:%s262] %v259
    %s264 = scalar_lea.vmem %s5, 120
    %v265 = vld [vmem:[%s264] sm:$0xff]
    %v266 = vlaneseq
    %v267 = vshrl.u32 %v266, 7
    %v268 = vadd.s32 %v267, 24
    %vm269 = vcmp.lt.s32.totalorder %v268, 90
    %v270 = vsel %vm269, %v265, %v12
    %v271 = vlaneseq
    %v272 = vand.u32 %v271, 127
    %v273 = vadd.s32 %v272, 384
    %vm274 = vcmp.lt.s32.totalorder %v273, 500
    %v275 = vsel %vm274, %v270, %v12
    %s276 = scalar_lea.vmem [#allocation9], 120
    %s278 = ssub.s32 256, 1
    %279 = vst [vmem:[%s276] sm:%s278] %v275
    %s280 = scalar_lea.vmem %s5, 128
    %v281 = vld [vmem:[%s280] sm:$0xff]
    %v282 = vlaneseq
    %v283 = vshrl.u32 %v282, 7
    %v284 = vadd.s32 %v283, 32
    %vm285 = vcmp.lt.s32.totalorder %v284, 90
    %v286 = vsel %vm285, %v281, %v12
    %v287 = vlaneseq
    %v288 = vand.u32 %v287, 127
    %vm290 = vcmp.lt.s32.totalorder %v288, 500
    %v291 = vsel %vm290, %v286, %v12
    %s292 = scalar_lea.vmem [#allocation9], 128
    %s294 = ssub.s32 256, 1
    %295 = vst [vmem:[%s292] sm:%s294] %v291
    %s296 = scalar_lea.vmem %s5, 136
    %v297 = vld [vmem:[%s296] sm:$0xff]
    %v298 = vlaneseq
    %v299 = vshrl.u32 %v298, 7
    %v300 = vadd.s32 %v299, 32
    %vm301 = vcmp.lt.s32.totalorder %v300, 90
    %v302 = vsel %vm301, %v297, %v12
    %v303 = vlaneseq
    %v304 = vand.u32 %v303, 127
    %v305 = vadd.s32 %v304, 128
    %vm306 = vcmp.lt.s32.totalorder %v305, 500
    %v307 = vsel %vm306, %v302, %v12
    %s308 = scalar_lea.vmem [#allocation9], 136
    %s310 = ssub.s32 256, 1
    %311 = vst [vmem:[%s308] sm:%s310] %v307
    %s312 = scalar_lea.vmem %s5, 144
    %v313 = vld [vmem:[%s312] sm:$0xff]
    %v314 = vlaneseq
    %v315 = vshrl.u32 %v314, 7
    %v316 = vadd.s32 %v315, 32
    %vm317 = vcmp.lt.s32.totalorder %v316, 90
    %v318 = vsel %vm317, %v313, %v12
    %v319 = vlaneseq
    %v320 = vand.u32 %v319, 127
    %v321 = vadd.s32 %v320, 256
    %vm322 = vcmp.lt.s32.totalorder %v321, 500
    %v323 = vsel %vm322, %v318, %v12
    %s324 = scalar_lea.vmem [#allocation9], 144
    %s326 = ssub.s32 256, 1
    %327 = vst [vmem:[%s324] sm:%s326] %v323
    %s328 = scalar_lea.vmem %s5, 152
    %v329 = vld [vmem:[%s328] sm:$0xff]
    %v330 = vlaneseq
    %v331 = vshrl.u32 %v330, 7
    %v332 = vadd.s32 %v331, 32
    %vm333 = vcmp.lt.s32.totalorder %v332, 90
    %v334 = vsel %vm333, %v329, %v12
    %v335 = vlaneseq
    %v336 = vand.u32 %v335, 127
    %v337 = vadd.s32 %v336, 384
    %vm338 = vcmp.lt.s32.totalorder %v337, 500
    %v339 = vsel %vm338, %v334, %v12
    %s340 = scalar_lea.vmem [#allocation9], 152
    %s342 = ssub.s32 256, 1
    %343 = vst [vmem:[%s340] sm:%s342] %v339
    %s344 = scalar_lea.vmem %s5, 160
    %v345 = vld [vmem:[%s344] sm:$0xff]
    %v346 = vlaneseq
    %v347 = vshrl.u32 %v346, 7
    %v348 = vadd.s32 %v347, 40
    %vm349 = vcmp.lt.s32.totalorder %v348, 90
    %v350 = vsel %vm349, %v345, %v12
    %v351 = vlaneseq
    %v352 = vand.u32 %v351, 127
    %vm354 = vcmp.lt.s32.totalorder %v352, 500
    %v355 = vsel %vm354, %v350, %v12
    %s356 = scalar_lea.vmem [#allocation9], 160
    %s358 = ssub.s32 256, 1
    %359 = vst [vmem:[%s356] sm:%s358] %v355
    %s360 = scalar_lea.vmem %s5, 168
    %v361 = vld [vmem:[%s360] sm:$0xff]
    %v362 = vlaneseq
    %v363 = vshrl.u32 %v362, 7
    %v364 = vadd.s32 %v363, 40
    %vm365 = vcmp.lt.s32.totalorder %v364, 90
    %v366 = vsel %vm365, %v361, %v12
    %v367 = vlaneseq
    %v368 = vand.u32 %v367, 127
    %v369 = vadd.s32 %v368, 128
    %vm370 = vcmp.lt.s32.totalorder %v369, 500
    %v371 = vsel %vm370, %v366, %v12
    %s372 = scalar_lea.vmem [#allocation9], 168
    %s374 = ssub.s32 256, 1
    %375 = vst [vmem:[%s372] sm:%s374] %v371
    %s376 = scalar_lea.vmem %s5, 176
    %v377 = vld [vmem:[%s376] sm:$0xff]
    %v378 = vlaneseq
    %v379 = vshrl.u32 %v378, 7
    %v380 = vadd.s32 %v379, 40
    %vm381 = vcmp.lt.s32.totalorder %v380, 90
    %v382 = vsel %vm381, %v377, %v12
    %v383 = vlaneseq
    %v384 = vand.u32 %v383, 127
    %v385 = vadd.s32 %v384, 256
    %vm386 = vcmp.lt.s32.totalorder %v385, 500
    %v387 = vsel %vm386, %v382, %v12
    %s388 = scalar_lea.vmem [#allocation9], 176
    %s390 = ssub.s32 256, 1
    %391 = vst [vmem:[%s388] sm:%s390] %v387
    %s392 = scalar_lea.vmem %s5, 184
    %v393 = vld [vmem:[%s392] sm:$0xff]
    %v394 = vlaneseq
    %v395 = vshrl.u32 %v394, 7
    %v396 = vadd.s32 %v395, 40
    %vm397 = vcmp.lt.s32.totalorder %v396, 90
    %v398 = vsel %vm397, %v393, %v12
    %v399 = vlaneseq
    %v400 = vand.u32 %v399, 127
    %v401 = vadd.s32 %v400, 384
    %vm402 = vcmp.lt.s32.totalorder %v401, 500
    %v403 = vsel %vm402, %v398, %v12
    %s404 = scalar_lea.vmem [#allocation9], 184
    %s406 = ssub.s32 256, 1
    %407 = vst [vmem:[%s404] sm:%s406] %v403
    %s408 = scalar_lea.vmem %s5, 192
    %v409 = vld [vmem:[%s408] sm:$0xff]
    %v410 = vlaneseq
    %v411 = vshrl.u32 %v410, 7
    %v412 = vadd.s32 %v411, 48
    %vm413 = vcmp.lt.s32.totalorder %v412, 90
    %v414 = vsel %vm413, %v409, %v12
    %v415 = vlaneseq
    %v416 = vand.u32 %v415, 127
    %vm418 = vcmp.lt.s32.totalorder %v416, 500
    %v419 = vsel %vm418, %v414, %v12
    %s420 = scalar_lea.vmem [#allocation9], 192
    %s422 = ssub.s32 256, 1
    %423 = vst [vmem:[%s420] sm:%s422] %v419
    %s424 = scalar_lea.vmem %s5, 200
    %v425 = vld [vmem:[%s424] sm:$0xff]
    %v426 = vlaneseq
    %v427 = vshrl.u32 %v426, 7
    %v428 = vadd.s32 %v427, 48
    %vm429 = vcmp.lt.s32.totalorder %v428, 90
    %v430 = vsel %vm429, %v425, %v12
    %v431 = vlaneseq
    %v432 = vand.u32 %v431, 127
    %v433 = vadd.s32 %v432, 128
    %vm434 = vcmp.lt.s32.totalorder %v433, 500
    %v435 = vsel %vm434, %v430, %v12
    %s436 = scalar_lea.vmem [#allocation9], 200
    %s438 = ssub.s32 256, 1
    %439 = vst [vmem:[%s436] sm:%s438] %v435
    %s440 = scalar_lea.vmem %s5, 208
    %v441 = vld [vmem:[%s440] sm:$0xff]
    %v442 = vlaneseq
    %v443 = vshrl.u32 %v442, 7
    %v444 = vadd.s32 %v443, 48
    %vm445 = vcmp.lt.s32.totalorder %v444, 90
    %v446 = vsel %vm445, %v441, %v12
    %v447 = vlaneseq
    %v448 = vand.u32 %v447, 127
    %v449 = vadd.s32 %v448, 256
    %vm450 = vcmp.lt.s32.totalorder %v449, 500
    %v451 = vsel %vm450, %v446, %v12
    %s452 = scalar_lea.vmem [#allocation9], 208
    %s454 = ssub.s32 256, 1
    %455 = vst [vmem:[%s452] sm:%s454] %v451
    %s456 = scalar_lea.vmem %s5, 216
    %v457 = vld [vmem:[%s456] sm:$0xff]
    %v458 = vlaneseq
    %v459 = vshrl.u32 %v458, 7
    %v460 = vadd.s32 %v459, 48
    %vm461 = vcmp.lt.s32.totalorder %v460, 90
    %v462 = vsel %vm461, %v457, %v12
    %v463 = vlaneseq
    %v464 = vand.u32 %v463, 127
    %v465 = vadd.s32 %v464, 384
    %vm466 = vcmp.lt.s32.totalorder %v465, 500
    %v467 = vsel %vm466, %v462, %v12
    %s468 = scalar_lea.vmem [#allocation9], 216
    %s470 = ssub.s32 256, 1
    %471 = vst [vmem:[%s468] sm:%s470] %v467
    %s472 = scalar_lea.vmem %s5, 224
    %v473 = vld [vmem:[%s472] sm:$0xff]
    %v474 = vlaneseq
    %v475 = vshrl.u32 %v474, 7
    %v476 = vadd.s32 %v475, 56
    %vm477 = vcmp.lt.s32.totalorder %v476, 90
    %v478 = vsel %vm477, %v473, %v12
    %v479 = vlaneseq
    %v480 = vand.u32 %v479, 127
    %vm482 = vcmp.lt.s32.totalorder %v480, 500
    %v483 = vsel %vm482, %v478, %v12
    %s484 = scalar_lea.vmem [#allocation9], 224
    %s486 = ssub.s32 256, 1
    %487 = vst [vmem:[%s484] sm:%s486] %v483
    %s488 = scalar_lea.vmem %s5, 232
    %v489 = vld [vmem:[%s488] sm:$0xff]
    %v490 = vlaneseq
    %v491 = vshrl.u32 %v490, 7
    %v492 = vadd.s32 %v491, 56
    %vm493 = vcmp.lt.s32.totalorder %v492, 90
    %v494 = vsel %vm493, %v489, %v12
    %v495 = vlaneseq
    %v496 = vand.u32 %v495, 127
    %v497 = vadd.s32 %v496, 128
    %vm498 = vcmp.lt.s32.totalorder %v497, 500
    %v499 = vsel %vm498, %v494, %v12
    %s500 = scalar_lea.vmem [#allocation9], 232
    %s502 = ssub.s32 256, 1
    %503 = vst [vmem:[%s500] sm:%s502] %v499
    %s504 = scalar_lea.vmem %s5, 240
    %v505 = vld [vmem:[%s504] sm:$0xff]
    %v506 = vlaneseq
    %v507 = vshrl.u32 %v506, 7
    %v508 = vadd.s32 %v507, 56
    %vm509 = vcmp.lt.s32.totalorder %v508, 90
    %v510 = vsel %vm509, %v505, %v12
    %v511 = vlaneseq
    %v512 = vand.u32 %v511, 127
    %v513 = vadd.s32 %v512, 256
    %vm514 = vcmp.lt.s32.totalorder %v513, 500
    %v515 = vsel %vm514, %v510, %v12
    %s516 = scalar_lea.vmem [#allocation9], 240
    %s518 = ssub.s32 256, 1
    %519 = vst [vmem:[%s516] sm:%s518] %v515
    %s520 = scalar_lea.vmem %s5, 248
    %v521 = vld [vmem:[%s520] sm:$0xff]
    %v522 = vlaneseq
    %v523 = vshrl.u32 %v522, 7
    %v524 = vadd.s32 %v523, 56
    %vm525 = vcmp.lt.s32.totalorder %v524, 90
    %v526 = vsel %vm525, %v521, %v12
    %v527 = vlaneseq
    %v528 = vand.u32 %v527, 127
    %v529 = vadd.s32 %v528, 384
    %vm530 = vcmp.lt.s32.totalorder %v529, 500
    %v531 = vsel %vm530, %v526, %v12
    %s532 = scalar_lea.vmem [#allocation9], 248
    %s534 = ssub.s32 256, 1
    %535 = vst [vmem:[%s532] sm:%s534] %v531
    %s536 = scalar_lea.vmem %s5, 256
    %v537 = vld [vmem:[%s536] sm:$0xff]
    %v538 = vlaneseq
    %v539 = vshrl.u32 %v538, 7
    %v540 = vadd.s32 %v539, 64
    %vm541 = vcmp.lt.s32.totalorder %v540, 90
    %v542 = vsel %vm541, %v537, %v12
    %v543 = vlaneseq
    %v544 = vand.u32 %v543, 127
    %vm546 = vcmp.lt.s32.totalorder %v544, 500
    %v547 = vsel %vm546, %v542, %v12
    %s548 = scalar_lea.vmem [#allocation9], 256
    %s550 = ssub.s32 256, 1
    %551 = vst [vmem:[%s548] sm:%s550] %v547
    %s552 = scalar_lea.vmem %s5, 264
    %v553 = vld [vmem:[%s552] sm:$0xff]
    %v554 = vlaneseq
    %v555 = vshrl.u32 %v554, 7
    %v556 = vadd.s32 %v555, 64
    %vm557 = vcmp.lt.s32.totalorder %v556, 90
    %v558 = vsel %vm557, %v553, %v12
    %v559 = vlaneseq
    %v560 = vand.u32 %v559, 127
    %v561 = vadd.s32 %v560, 128
    %vm562 = vcmp.lt.s32.totalorder %v561, 500
    %v563 = vsel %vm562, %v558, %v12
    %s564 = scalar_lea.vmem [#allocation9], 264
    %s566 = ssub.s32 256, 1
    %567 = vst [vmem:[%s564] sm:%s566] %v563
    %s568 = scalar_lea.vmem %s5, 272
    %v569 = vld [vmem:[%s568] sm:$0xff]
    %v570 = vlaneseq
    %v571 = vshrl.u32 %v570, 7
    %v572 = vadd.s32 %v571, 64
    %vm573 = vcmp.lt.s32.totalorder %v572, 90
    %v574 = vsel %vm573, %v569, %v12
    %v575 = vlaneseq
    %v576 = vand.u32 %v575, 127
    %v577 = vadd.s32 %v576, 256
    %vm578 = vcmp.lt.s32.totalorder %v577, 500
    %v579 = vsel %vm578, %v574, %v12
    %s580 = scalar_lea.vmem [#allocation9], 272
    %s582 = ssub.s32 256, 1
    %583 = vst [vmem:[%s580] sm:%s582] %v579
    %s584 = scalar_lea.vmem %s5, 280
    %v585 = vld [vmem:[%s584] sm:$0xff]
    %v586 = vlaneseq
    %v587 = vshrl.u32 %v586, 7
    %v588 = vadd.s32 %v587, 64
    %vm589 = vcmp.lt.s32.totalorder %v588, 90
    %v590 = vsel %vm589, %v585, %v12
    %v591 = vlaneseq
    %v592 = vand.u32 %v591, 127
    %v593 = vadd.s32 %v592, 384
    %vm594 = vcmp.lt.s32.totalorder %v593, 500
    %v595 = vsel %vm594, %v590, %v12
    %s596 = scalar_lea.vmem [#allocation9], 280
    %s598 = ssub.s32 256, 1
    %599 = vst [vmem:[%s596] sm:%s598] %v595
    %s600 = scalar_lea.vmem %s5, 288
    %v601 = vld [vmem:[%s600] sm:$0xff]
    %v602 = vlaneseq
    %v603 = vshrl.u32 %v602, 7
    %v604 = vadd.s32 %v603, 72
    %vm605 = vcmp.lt.s32.totalorder %v604, 90
    %v606 = vsel %vm605, %v601, %v12
    %v607 = vlaneseq
    %v608 = vand.u32 %v607, 127
    %vm610 = vcmp.lt.s32.totalorder %v608, 500
    %v611 = vsel %vm610, %v606, %v12
    %s612 = scalar_lea.vmem [#allocation9], 288
    %s614 = ssub.s32 256, 1
    %615 = vst [vmem:[%s612] sm:%s614] %v611
    %s616 = scalar_lea.vmem %s5, 296
    %v617 = vld [vmem:[%s616] sm:$0xff]
    %v618 = vlaneseq
    %v619 = vshrl.u32 %v618, 7
    %v620 = vadd.s32 %v619, 72
    %vm621 = vcmp.lt.s32.totalorder %v620, 90
    %v622 = vsel %vm621, %v617, %v12
    %v623 = vlaneseq
    %v624 = vand.u32 %v623, 127
    %v625 = vadd.s32 %v624, 128
    %vm626 = vcmp.lt.s32.totalorder %v625, 500
    %v627 = vsel %vm626, %v622, %v12
    %s628 = scalar_lea.vmem [#allocation9], 296
    %s630 = ssub.s32 256, 1
    %631 = vst [vmem:[%s628] sm:%s630] %v627
    %s632 = scalar_lea.vmem %s5, 304
    %v633 = vld [vmem:[%s632] sm:$0xff]
    %v634 = vlaneseq
    %v635 = vshrl.u32 %v634, 7
    %v636 = vadd.s32 %v635, 72
    %vm637 = vcmp.lt.s32.totalorder %v636, 90
    %v638 = vsel %vm637, %v633, %v12
    %v639 = vlaneseq
    %v640 = vand.u32 %v639, 127
    %v641 = vadd.s32 %v640, 256
    %vm642 = vcmp.lt.s32.totalorder %v641, 500
    %v643 = vsel %vm642, %v638, %v12
    %s644 = scalar_lea.vmem [#allocation9], 304
    %s646 = ssub.s32 256, 1
    %647 = vst [vmem:[%s644] sm:%s646] %v643
    %s648 = scalar_lea.vmem %s5, 312
    %v649 = vld [vmem:[%s648] sm:$0xff]
    %v650 = vlaneseq
    %v651 = vshrl.u32 %v650, 7
    %v652 = vadd.s32 %v651, 72
    %vm653 = vcmp.lt.s32.totalorder %v652, 90
    %v654 = vsel %vm653, %v649, %v12
    %v655 = vlaneseq
    %v656 = vand.u32 %v655, 127
    %v657 = vadd.s32 %v656, 384
    %vm658 = vcmp.lt.s32.totalorder %v657, 500
    %v659 = vsel %vm658, %v654, %v12
    %s660 = scalar_lea.vmem [#allocation9], 312
    %s662 = ssub.s32 256, 1
    %663 = vst [vmem:[%s660] sm:%s662] %v659
    %s664 = scalar_lea.vmem %s5, 320
    %v665 = vld [vmem:[%s664] sm:$0xff]
    %v666 = vlaneseq
    %v667 = vshrl.u32 %v666, 7
    %v668 = vadd.s32 %v667, 80
    %vm669 = vcmp.lt.s32.totalorder %v668, 90
    %v670 = vsel %vm669, %v665, %v12
    %v671 = vlaneseq
    %v672 = vand.u32 %v671, 127
    %vm674 = vcmp.lt.s32.totalorder %v672, 500
    %v675 = vsel %vm674, %v670, %v12
    %s676 = scalar_lea.vmem [#allocation9], 320
    %s678 = ssub.s32 256, 1
    %679 = vst [vmem:[%s676] sm:%s678] %v675
    %s680 = scalar_lea.vmem %s5, 328
    %v681 = vld [vmem:[%s680] sm:$0xff]
    %v682 = vlaneseq
    %v683 = vshrl.u32 %v682, 7
    %v684 = vadd.s32 %v683, 80
    %vm685 = vcmp.lt.s32.totalorder %v684, 90
    %v686 = vsel %vm685, %v681, %v12
    %v687 = vlaneseq
    %v688 = vand.u32 %v687, 127
    %v689 = vadd.s32 %v688, 128
    %vm690 = vcmp.lt.s32.totalorder %v689, 500
    %v691 = vsel %vm690, %v686, %v12
    %s692 = scalar_lea.vmem [#allocation9], 328
    %s694 = ssub.s32 256, 1
    %695 = vst [vmem:[%s692] sm:%s694] %v691
    %s696 = scalar_lea.vmem %s5, 336
    %v697 = vld [vmem:[%s696] sm:$0xff]
    %v698 = vlaneseq
    %v699 = vshrl.u32 %v698, 7
    %v700 = vadd.s32 %v699, 80
    %vm701 = vcmp.lt.s32.totalorder %v700, 90
    %v702 = vsel %vm701, %v697, %v12
    %v703 = vlaneseq
    %v704 = vand.u32 %v703, 127
    %v705 = vadd.s32 %v704, 256
    %vm706 = vcmp.lt.s32.totalorder %v705, 500
    %v707 = vsel %vm706, %v702, %v12
    %s708 = scalar_lea.vmem [#allocation9], 336
    %s710 = ssub.s32 256, 1
    %711 = vst [vmem:[%s708] sm:%s710] %v707
    %s712 = scalar_lea.vmem %s5, 344
    %v713 = vld [vmem:[%s712] sm:$0xff]
    %v714 = vlaneseq
    %v715 = vshrl.u32 %v714, 7
    %v716 = vadd.s32 %v715, 80
    %vm717 = vcmp.lt.s32.totalorder %v716, 90
    %v718 = vsel %vm717, %v713, %v12
    %v719 = vlaneseq
    %v720 = vand.u32 %v719, 127
    %v721 = vadd.s32 %v720, 384
    %vm722 = vcmp.lt.s32.totalorder %v721, 500
    %v723 = vsel %vm722, %v718, %v12
    %s724 = scalar_lea.vmem [#allocation9], 344
    %s726 = ssub.s32 256, 1
    %727 = vst [vmem:[%s724] sm:%s726] %v723
    %s728 = scalar_lea.vmem %s5, 352
    %v729 = vld [vmem:[%s728] sm:$0xff]
    %v730 = vlaneseq
    %v731 = vshrl.u32 %v730, 7
    %v732 = vadd.s32 %v731, 88
    %vm733 = vcmp.lt.s32.totalorder %v732, 90
    %v734 = vsel %vm733, %v729, %v12
    %v735 = vlaneseq
    %v736 = vand.u32 %v735, 127
    %vm738 = vcmp.lt.s32.totalorder %v736, 500
    %v739 = vsel %vm738, %v734, %v12
    %s740 = scalar_lea.vmem [#allocation9], 352
    %s742 = ssub.s32 256, 1
    %743 = vst [vmem:[%s740] sm:%s742] %v739
    %s744 = scalar_lea.vmem %s5, 360
    %v745 = vld [vmem:[%s744] sm:$0xff]
    %v746 = vlaneseq
    %v747 = vshrl.u32 %v746, 7
    %v748 = vadd.s32 %v747, 88
    %vm749 = vcmp.lt.s32.totalorder %v748, 90
    %v750 = vsel %vm749, %v745, %v12
    %v751 = vlaneseq
    %v752 = vand.u32 %v751, 127
    %v753 = vadd.s32 %v752, 128
    %vm754 = vcmp.lt.s32.totalorder %v753, 500
    %v755 = vsel %vm754, %v750, %v12
    %s756 = scalar_lea.vmem [#allocation9], 360
    %s758 = ssub.s32 256, 1
    %759 = vst [vmem:[%s756] sm:%s758] %v755
    %s760 = scalar_lea.vmem %s5, 368
    %v761 = vld [vmem:[%s760] sm:$0xff]
    %v762 = vlaneseq
    %v763 = vshrl.u32 %v762, 7
    %v764 = vadd.s32 %v763, 88
    %vm765 = vcmp.lt.s32.totalorder %v764, 90
    %v766 = vsel %vm765, %v761, %v12
    %v767 = vlaneseq
    %v768 = vand.u32 %v767, 127
    %v769 = vadd.s32 %v768, 256
    %vm770 = vcmp.lt.s32.totalorder %v769, 500
    %v771 = vsel %vm770, %v766, %v12
    %s772 = scalar_lea.vmem [#allocation9], 368
    %s774 = ssub.s32 256, 1
    %775 = vst [vmem:[%s772] sm:%s774] %v771
    %s776 = scalar_lea.vmem %s5, 376
    %v777 = vld [vmem:[%s776] sm:$0xff]
    %v778 = vlaneseq
    %v779 = vshrl.u32 %v778, 7
    %v780 = vadd.s32 %v779, 88
    %vm781 = vcmp.lt.s32.totalorder %v780, 90
    %v782 = vsel %vm781, %v777, %v12
    %v783 = vlaneseq
    %v784 = vand.u32 %v783, 127
    %v785 = vadd.s32 %v784, 384
    %vm786 = vcmp.lt.s32.totalorder %v785, 500
    %v787 = vsel %vm786, %v782, %v12
    %s788 = scalar_lea.vmem [#allocation9], 376
    %s790 = ssub.s32 256, 1
    %791 = vst [vmem:[%s788] sm:%s790] %v787
    %s792 = scalar_lea.vmem %s5, 384
    %v793 = vld [vmem:[%s792] sm:$0xff]
    %v794 = vlaneseq
    %v795 = vshrl.u32 %v794, 7
    %vm797 = vcmp.lt.s32.totalorder %v795, 90
    %v798 = vsel %vm797, %v793, %v12
    %v799 = vlaneseq
    %v800 = vand.u32 %v799, 127
    %vm802 = vcmp.lt.s32.totalorder %v800, 500
    %v803 = vsel %vm802, %v798, %v12
    %s804 = scalar_lea.vmem [#allocation9], 384
    %s806 = ssub.s32 256, 1
    %807 = vst [vmem:[%s804] sm:%s806] %v803
    %s808 = scalar_lea.vmem %s5, 392
    %v809 = vld [vmem:[%s808] sm:$0xff]
    %v810 = vlaneseq
    %v811 = vshrl.u32 %v810, 7
    %vm813 = vcmp.lt.s32.totalorder %v811, 90
    %v814 = vsel %vm813, %v809, %v12
    %v815 = vlaneseq
    %v816 = vand.u32 %v815, 127
    %v817 = vadd.s32 %v816, 128
    %vm818 = vcmp.lt.s32.totalorder %v817, 500
    %v819 = vsel %vm818, %v814, %v12
    %s820 = scalar_lea.vmem [#allocation9], 392
    %s822 = ssub.s32 256, 1
    %823 = vst [vmem:[%s820] sm:%s822] %v819
    %s824 = scalar_lea.vmem %s5, 400
    %v825 = vld [vmem:[%s824] sm:$0xff]
    %v826 = vlaneseq
    %v827 = vshrl.u32 %v826, 7
    %vm829 = vcmp.lt.s32.totalorder %v827, 90
    %v830 = vsel %vm829, %v825, %v12
    %v831 = vlaneseq
    %v832 = vand.u32 %v831, 127
    %v833 = vadd.s32 %v832, 256
    %vm834 = vcmp.lt.s32.totalorder %v833, 500
    %v835 = vsel %vm834, %v830, %v12
    %s836 = scalar_lea.vmem [#allocation9], 400
    %s838 = ssub.s32 256, 1
    %839 = vst [vmem:[%s836] sm:%s838] %v835
    %s840 = scalar_lea.vmem %s5, 408
    %v841 = vld [vmem:[%s840] sm:$0xff]
    %v842 = vlaneseq
    %v843 = vshrl.u32 %v842, 7
    %vm845 = vcmp.lt.s32.totalorder %v843, 90
    %v846 = vsel %vm845, %v841, %v12
    %v847 = vlaneseq
    %v848 = vand.u32 %v847, 127
    %v849 = vadd.s32 %v848, 384
    %vm850 = vcmp.lt.s32.totalorder %v849, 500
    %v851 = vsel %vm850, %v846, %v12
    %s852 = scalar_lea.vmem [#allocation9], 408
    %s854 = ssub.s32 256, 1
    %855 = vst [vmem:[%s852] sm:%s854] %v851
    %s856 = scalar_lea.vmem %s5, 416
    %v857 = vld [vmem:[%s856] sm:$0xff]
    %v858 = vlaneseq
    %v859 = vshrl.u32 %v858, 7
    %v860 = vadd.s32 %v859, 8
    %vm861 = vcmp.lt.s32.totalorder %v860, 90
    %v862 = vsel %vm861, %v857, %v12
    %v863 = vlaneseq
    %v864 = vand.u32 %v863, 127
    %vm866 = vcmp.lt.s32.totalorder %v864, 500
    %v867 = vsel %vm866, %v862, %v12
    %s868 = scalar_lea.vmem [#allocation9], 416
    %s870 = ssub.s32 256, 1
    %871 = vst [vmem:[%s868] sm:%s870] %v867
    %s872 = scalar_lea.vmem %s5, 424
    %v873 = vld [vmem:[%s872] sm:$0xff]
    %v874 = vlaneseq
    %v875 = vshrl.u32 %v874, 7
    %v876 = vadd.s32 %v875, 8
    %vm877 = vcmp.lt.s32.totalorder %v876, 90
    %v878 = vsel %vm877, %v873, %v12
    %v879 = vlaneseq
    %v880 = vand.u32 %v879, 127
    %v881 = vadd.s32 %v880, 128
    %vm882 = vcmp.lt.s32.totalorder %v881, 500
    %v883 = vsel %vm882, %v878, %v12
    %s884 = scalar_lea.vmem [#allocation9], 424
    %s886 = ssub.s32 256, 1
    %887 = vst [vmem:[%s884] sm:%s886] %v883
    %s888 = scalar_lea.vmem %s5, 432
    %v889 = vld [vmem:[%s888] sm:$0xff]
    %v890 = vlaneseq
    %v891 = vshrl.u32 %v890, 7
    %v892 = vadd.s32 %v891, 8
    %vm893 = vcmp.lt.s32.totalorder %v892, 90
    %v894 = vsel %vm893, %v889, %v12
    %v895 = vlaneseq
    %v896 = vand.u32 %v895, 127
    %v897 = vadd.s32 %v896, 256
    %vm898 = vcmp.lt.s32.totalorder %v897, 500
    %v899 = vsel %vm898, %v894, %v12
    %s900 = scalar_lea.vmem [#allocation9], 432
    %s902 = ssub.s32 256, 1
    %903 = vst [vmem:[%s900] sm:%s902] %v899
    %s904 = scalar_lea.vmem %s5, 440
    %v905 = vld [vmem:[%s904] sm:$0xff]
    %v906 = vlaneseq
    %v907 = vshrl.u32 %v906, 7
    %v908 = vadd.s32 %v907, 8
    %vm909 = vcmp.lt.s32.totalorder %v908, 90
    %v910 = vsel %vm909, %v905, %v12
    %v911 = vlaneseq
    %v912 = vand.u32 %v911, 127
    %v913 = vadd.s32 %v912, 384
    %vm914 = vcmp.lt.s32.totalorder %v913, 500
    %v915 = vsel %vm914, %v910, %v12
    %s916 = scalar_lea.vmem [#allocation9], 440
    %s918 = ssub.s32 256, 1
    %919 = vst [vmem:[%s916] sm:%s918] %v915
    %s920 = scalar_lea.vmem %s5, 448
    %v921 = vld [vmem:[%s920] sm:$0xff]
    %v922 = vlaneseq
    %v923 = vshrl.u32 %v922, 7
    %v924 = vadd.s32 %v923, 16
    %vm925 = vcmp.lt.s32.totalorder %v924, 90
    %v926 = vsel %vm925, %v921, %v12
    %v927 = vlaneseq
    %v928 = vand.u32 %v927, 127
    %vm930 = vcmp.lt.s32.totalorder %v928, 500
    %v931 = vsel %vm930, %v926, %v12
    %s932 = scalar_lea.vmem [#allocation9], 448
    %s934 = ssub.s32 256, 1
    %935 = vst [vmem:[%s932] sm:%s934] %v931
    %s936 = scalar_lea.vmem %s5, 456
    %v937 = vld [vmem:[%s936] sm:$0xff]
    %v938 = vlaneseq
    %v939 = vshrl.u32 %v938, 7
    %v940 = vadd.s32 %v939, 16
    %vm941 = vcmp.lt.s32.totalorder %v940, 90
    %v942 = vsel %vm941, %v937, %v12
    %v943 = vlaneseq
    %v944 = vand.u32 %v943, 127
    %v945 = vadd.s32 %v944, 128
    %vm946 = vcmp.lt.s32.totalorder %v945, 500
    %v947 = vsel %vm946, %v942, %v12
    %s948 = scalar_lea.vmem [#allocation9], 456
    %s950 = ssub.s32 256, 1
    %951 = vst [vmem:[%s948] sm:%s950] %v947
    %s952 = scalar_lea.vmem %s5, 464
    %v953 = vld [vmem:[%s952] sm:$0xff]
    %v954 = vlaneseq
    %v955 = vshrl.u32 %v954, 7
    %v956 = vadd.s32 %v955, 16
    %vm957 = vcmp.lt.s32.totalorder %v956, 90
    %v958 = vsel %vm957, %v953, %v12
    %v959 = vlaneseq
    %v960 = vand.u32 %v959, 127
    %v961 = vadd.s32 %v960, 256
    %vm962 = vcmp.lt.s32.totalorder %v961, 500
    %v963 = vsel %vm962, %v958, %v12
    %s964 = scalar_lea.vmem [#allocation9], 464
    %s966 = ssub.s32 256, 1
    %967 = vst [vmem:[%s964] sm:%s966] %v963
    %s968 = scalar_lea.vmem %s5, 472
    %v969 = vld [vmem:[%s968] sm:$0xff]
    %v970 = vlaneseq
    %v971 = vshrl.u32 %v970, 7
    %v972 = vadd.s32 %v971, 16
    %vm973 = vcmp.lt.s32.totalorder %v972, 90
    %v974 = vsel %vm973, %v969, %v12
    %v975 = vlaneseq
    %v976 = vand.u32 %v975, 127
    %v977 = vadd.s32 %v976, 384
    %vm978 = vcmp.lt.s32.totalorder %v977, 500
    %v979 = vsel %vm978, %v974, %v12
    %s980 = scalar_lea.vmem [#allocation9], 472
    %s982 = ssub.s32 256, 1
    %983 = vst [vmem:[%s980] sm:%s982] %v979
    %s984 = scalar_lea.vmem %s5, 480
    %v985 = vld [vmem:[%s984] sm:$0xff]
    %v986 = vlaneseq
    %v987 = vshrl.u32 %v986, 7
    %v988 = vadd.s32 %v987, 24
    %vm989 = vcmp.lt.s32.totalorder %v988, 90
    %v990 = vsel %vm989, %v985, %v12
    %v991 = vlaneseq
    %v992 = vand.u32 %v991, 127
    %vm994 = vcmp.lt.s32.totalorder %v992, 500
    %v995 = vsel %vm994, %v990, %v12
    %s996 = scalar_lea.vmem [#allocation9], 480
    %s998 = ssub.s32 256, 1
    %999 = vst [vmem:[%s996] sm:%s998] %v995
    %s1000 = scalar_lea.vmem %s5, 488
    %v1001 = vld [vmem:[%s1000] sm:$0xff]
    %v1002 = vlaneseq
    %v1003 = vshrl.u32 %v1002, 7
    %v1004 = vadd.s32 %v1003, 24
    %vm1005 = vcmp.lt.s32.totalorder %v1004, 90
    %v1006 = vsel %vm1005, %v1001, %v12
    %v1007 = vlaneseq
    %v1008 = vand.u32 %v1007, 127
    %v1009 = vadd.s32 %v1008, 128
    %vm1010 = vcmp.lt.s32.totalorder %v1009, 500
    %v1011 = vsel %vm1010, %v1006, %v12
    %s1012 = scalar_lea.vmem [#allocation9], 488
    %s1014 = ssub.s32 256, 1
    %1015 = vst [vmem:[%s1012] sm:%s1014] %v1011
    %s1016 = scalar_lea.vmem %s5, 496
    %v1017 = vld [vmem:[%s1016] sm:$0xff]
    %v1018 = vlaneseq
    %v1019 = vshrl.u32 %v1018, 7
    %v1020 = vadd.s32 %v1019, 24
    %vm1021 = vcmp.lt.s32.totalorder %v1020, 90
    %v1022 = vsel %vm1021, %v1017, %v12
    %v1023 = vlaneseq
    %v1024 = vand.u32 %v1023, 127
    %v1025 = vadd.s32 %v1024, 256
    %vm1026 = vcmp.lt.s32.totalorder %v1025, 500
    %v1027 = vsel %vm1026, %v1022, %v12
    %s1028 = scalar_lea.vmem [#allocation9], 496
    %s1030 = ssub.s32 256, 1
    %1031 = vst [vmem:[%s1028] sm:%s1030] %v1027
    %s1032 = scalar_lea.vmem %s5, 504
    %v1033 = vld [vmem:[%s1032] sm:$0xff]
    %v1034 = vlaneseq
    %v1035 = vshrl.u32 %v1034, 7
    %v1036 = vadd.s32 %v1035, 24
    %vm1037 = vcmp.lt.s32.totalorder %v1036, 90
    %v1038 = vsel %vm1037, %v1033, %v12
    %v1039 = vlaneseq
    %v1040 = vand.u32 %v1039, 127
    %v1041 = vadd.s32 %v1040, 384
    %vm1042 = vcmp.lt.s32.totalorder %v1041, 500
    %v1043 = vsel %vm1042, %v1038, %v12
    %s1044 = scalar_lea.vmem [#allocation9], 504
    %s1046 = ssub.s32 256, 1
    %1047 = vst [vmem:[%s1044] sm:%s1046] %v1043
    %s1048 = scalar_lea.vmem %s5, 512
    %v1049 = vld [vmem:[%s1048] sm:$0xff]
    %v1050 = vlaneseq
    %v1051 = vshrl.u32 %v1050, 7
    %v1052 = vadd.s32 %v1051, 32
    %vm1053 = vcmp.lt.s32.totalorder %v1052, 90
    %v1054 = vsel %vm1053, %v1049, %v12
    %v1055 = vlaneseq
    %v1056 = vand.u32 %v1055, 127
    %vm1058 = vcmp.lt.s32.totalorder %v1056, 500
    %v1059 = vsel %vm1058, %v1054, %v12
    %s1060 = scalar_lea.vmem [#allocation9], 512
    %s1062 = ssub.s32 256, 1
    %1063 = vst [vmem:[%s1060] sm:%s1062] %v1059
    %s1064 = scalar_lea.vmem %s5, 520
    %v1065 = vld [vmem:[%s1064] sm:$0xff]
    %v1066 = vlaneseq
    %v1067 = vshrl.u32 %v1066, 7
    %v1068 = vadd.s32 %v1067, 32
    %vm1069 = vcmp.lt.s32.totalorder %v1068, 90
    %v1070 = vsel %vm1069, %v1065, %v12
    %v1071 = vlaneseq
    %v1072 = vand.u32 %v1071, 127
    %v1073 = vadd.s32 %v1072, 128
    %vm1074 = vcmp.lt.s32.totalorder %v1073, 500
    %v1075 = vsel %vm1074, %v1070, %v12
    %s1076 = scalar_lea.vmem [#allocation9], 520
    %s1078 = ssub.s32 256, 1
    %1079 = vst [vmem:[%s1076] sm:%s1078] %v1075
    %s1080 = scalar_lea.vmem %s5, 528
    %v1081 = vld [vmem:[%s1080] sm:$0xff]
    %v1082 = vlaneseq
    %v1083 = vshrl.u32 %v1082, 7
    %v1084 = vadd.s32 %v1083, 32
    %vm1085 = vcmp.lt.s32.totalorder %v1084, 90
    %v1086 = vsel %vm1085, %v1081, %v12
    %v1087 = vlaneseq
    %v1088 = vand.u32 %v1087, 127
    %v1089 = vadd.s32 %v1088, 256
    %vm1090 = vcmp.lt.s32.totalorder %v1089, 500
    %v1091 = vsel %vm1090, %v1086, %v12
    %s1092 = scalar_lea.vmem [#allocation9], 528
    %s1094 = ssub.s32 256, 1
    %1095 = vst [vmem:[%s1092] sm:%s1094] %v1091
    %s1096 = scalar_lea.vmem %s5, 536
    %v1097 = vld [vmem:[%s1096] sm:$0xff]
    %v1098 = vlaneseq
    %v1099 = vshrl.u32 %v1098, 7
    %v1100 = vadd.s32 %v1099, 32
    %vm1101 = vcmp.lt.s32.totalorder %v1100, 90
    %v1102 = vsel %vm1101, %v1097, %v12
    %v1103 = vlaneseq
    %v1104 = vand.u32 %v1103, 127
    %v1105 = vadd.s32 %v1104, 384
    %vm1106 = vcmp.lt.s32.totalorder %v1105, 500
    %v1107 = vsel %vm1106, %v1102, %v12
    %s1108 = scalar_lea.vmem [#allocation9], 536
    %s1110 = ssub.s32 256, 1
    %1111 = vst [vmem:[%s1108] sm:%s1110] %v1107
    %s1112 = scalar_lea.vmem %s5, 544
    %v1113 = vld [vmem:[%s1112] sm:$0xff]
    %v1114 = vlaneseq
    %v1115 = vshrl.u32 %v1114, 7
    %v1116 = vadd.s32 %v1115, 40
    %vm1117 = vcmp.lt.s32.totalorder %v1116, 90
    %v1118 = vsel %vm1117, %v1113, %v12
    %v1119 = vlaneseq
    %v1120 = vand.u32 %v1119, 127
    %vm1122 = vcmp.lt.s32.totalorder %v1120, 500
    %v1123 = vsel %vm1122, %v1118, %v12
    %s1124 = scalar_lea.vmem [#allocation9], 544
    %s1126 = ssub.s32 256, 1
    %1127 = vst [vmem:[%s1124] sm:%s1126] %v1123
    %s1128 = scalar_lea.vmem %s5, 552
    %v1129 = vld [vmem:[%s1128] sm:$0xff]
    %v1130 = vlaneseq
    %v1131 = vshrl.u32 %v1130, 7
    %v1132 = vadd.s32 %v1131, 40
    %vm1133 = vcmp.lt.s32.totalorder %v1132, 90
    %v1134 = vsel %vm1133, %v1129, %v12
    %v1135 = vlaneseq
    %v1136 = vand.u32 %v1135, 127
    %v1137 = vadd.s32 %v1136, 128
    %vm1138 = vcmp.lt.s32.totalorder %v1137, 500
    %v1139 = vsel %vm1138, %v1134, %v12
    %s1140 = scalar_lea.vmem [#allocation9], 552
    %s1142 = ssub.s32 256, 1
    %1143 = vst [vmem:[%s1140] sm:%s1142] %v1139
    %s1144 = scalar_lea.vmem %s5, 560
    %v1145 = vld [vmem:[%s1144] sm:$0xff]
    %v1146 = vlaneseq
    %v1147 = vshrl.u32 %v1146, 7
    %v1148 = vadd.s32 %v1147, 40
    %vm1149 = vcmp.lt.s32.totalorder %v1148, 90
    %v1150 = vsel %vm1149, %v1145, %v12
    %v1151 = vlaneseq
    %v1152 = vand.u32 %v1151, 127
    %v1153 = vadd.s32 %v1152, 256
    %vm1154 = vcmp.lt.s32.totalorder %v1153, 500
    %v1155 = vsel %vm1154, %v1150, %v12
    %s1156 = scalar_lea.vmem [#allocation9], 560
    %s1158 = ssub.s32 256, 1
    %1159 = vst [vmem:[%s1156] sm:%s1158] %v1155
    %s1160 = scalar_lea.vmem %s5, 568
    %v1161 = vld [vmem:[%s1160] sm:$0xff]
    %v1162 = vlaneseq
    %v1163 = vshrl.u32 %v1162, 7
    %v1164 = vadd.s32 %v1163, 40
    %vm1165 = vcmp.lt.s32.totalorder %v1164, 90
    %v1166 = vsel %vm1165, %v1161, %v12
    %v1167 = vlaneseq
    %v1168 = vand.u32 %v1167, 127
    %v1169 = vadd.s32 %v1168, 384
    %vm1170 = vcmp.lt.s32.totalorder %v1169, 500
    %v1171 = vsel %vm1170, %v1166, %v12
    %s1172 = scalar_lea.vmem [#allocation9], 568
    %s1174 = ssub.s32 256, 1
    %1175 = vst [vmem:[%s1172] sm:%s1174] %v1171
    %s1176 = scalar_lea.vmem %s5, 576
    %v1177 = vld [vmem:[%s1176] sm:$0xff]
    %v1178 = vlaneseq
    %v1179 = vshrl.u32 %v1178, 7
    %v1180 = vadd.s32 %v1179, 48
    %vm1181 = vcmp.lt.s32.totalorder %v1180, 90
    %v1182 = vsel %vm1181, %v1177, %v12
    %v1183 = vlaneseq
    %v1184 = vand.u32 %v1183, 127
    %vm1186 = vcmp.lt.s32.totalorder %v1184, 500
    %v1187 = vsel %vm1186, %v1182, %v12
    %s1188 = scalar_lea.vmem [#allocation9], 576
    %s1190 = ssub.s32 256, 1
    %1191 = vst [vmem:[%s1188] sm:%s1190] %v1187
    %s1192 = scalar_lea.vmem %s5, 584
    %v1193 = vld [vmem:[%s1192] sm:$0xff]
    %v1194 = vlaneseq
    %v1195 = vshrl.u32 %v1194, 7
    %v1196 = vadd.s32 %v1195, 48
    %vm1197 = vcmp.lt.s32.totalorder %v1196, 90
    %v1198 = vsel %vm1197, %v1193, %v12
    %v1199 = vlaneseq
    %v1200 = vand.u32 %v1199, 127
    %v1201 = vadd.s32 %v1200, 128
    %vm1202 = vcmp.lt.s32.totalorder %v1201, 500
    %v1203 = vsel %vm1202, %v1198, %v12
    %s1204 = scalar_lea.vmem [#allocation9], 584
    %s1206 = ssub.s32 256, 1
    %1207 = vst [vmem:[%s1204] sm:%s1206] %v1203
    %s1208 = scalar_lea.vmem %s5, 592
    %v1209 = vld [vmem:[%s1208] sm:$0xff]
    %v1210 = vlaneseq
    %v1211 = vshrl.u32 %v1210, 7
    %v1212 = vadd.s32 %v1211, 48
    %vm1213 = vcmp.lt.s32.totalorder %v1212, 90
    %v1214 = vsel %vm1213, %v1209, %v12
    %v1215 = vlaneseq
    %v1216 = vand.u32 %v1215, 127
    %v1217 = vadd.s32 %v1216, 256
    %vm1218 = vcmp.lt.s32.totalorder %v1217, 500
    %v1219 = vsel %vm1218, %v1214, %v12
    %s1220 = scalar_lea.vmem [#allocation9], 592
    %s1222 = ssub.s32 256, 1
    %1223 = vst [vmem:[%s1220] sm:%s1222] %v1219
    %s1224 = scalar_lea.vmem %s5, 600
    %v1225 = vld [vmem:[%s1224] sm:$0xff]
    %v1226 = vlaneseq
    %v1227 = vshrl.u32 %v1226, 7
    %v1228 = vadd.s32 %v1227, 48
    %vm1229 = vcmp.lt.s32.totalorder %v1228, 90
    %v1230 = vsel %vm1229, %v1225, %v12
    %v1231 = vlaneseq
    %v1232 = vand.u32 %v1231, 127
    %v1233 = vadd.s32 %v1232, 384
    %vm1234 = vcmp.lt.s32.totalorder %v1233, 500
    %v1235 = vsel %vm1234, %v1230, %v12
    %s1236 = scalar_lea.vmem [#allocation9], 600
    %s1238 = ssub.s32 256, 1
    %1239 = vst [vmem:[%s1236] sm:%s1238] %v1235
    %s1240 = scalar_lea.vmem %s5, 608
    %v1241 = vld [vmem:[%s1240] sm:$0xff]
    %v1242 = vlaneseq
    %v1243 = vshrl.u32 %v1242, 7
    %v1244 = vadd.s32 %v1243, 56
    %vm1245 = vcmp.lt.s32.totalorder %v1244, 90
    %v1246 = vsel %vm1245, %v1241, %v12
    %v1247 = vlaneseq
    %v1248 = vand.u32 %v1247, 127
    %vm1250 = vcmp.lt.s32.totalorder %v1248, 500
    %v1251 = vsel %vm1250, %v1246, %v12
    %s1252 = scalar_lea.vmem [#allocation9], 608
    %s1254 = ssub.s32 256, 1
    %1255 = vst [vmem:[%s1252] sm:%s1254] %v1251
    %s1256 = scalar_lea.vmem %s5, 616
    %v1257 = vld [vmem:[%s1256] sm:$0xff]
    %v1258 = vlaneseq
    %v1259 = vshrl.u32 %v1258, 7
    %v1260 = vadd.s32 %v1259, 56
    %vm1261 = vcmp.lt.s32.totalorder %v1260, 90
    %v1262 = vsel %vm1261, %v1257, %v12
    %v1263 = vlaneseq
    %v1264 = vand.u32 %v1263, 127
    %v1265 = vadd.s32 %v1264, 128
    %vm1266 = vcmp.lt.s32.totalorder %v1265, 500
    %v1267 = vsel %vm1266, %v1262, %v12
    %s1268 = scalar_lea.vmem [#allocation9], 616
    %s1270 = ssub.s32 256, 1
    %1271 = vst [vmem:[%s1268] sm:%s1270] %v1267
    %s1272 = scalar_lea.vmem %s5, 624
    %v1273 = vld [vmem:[%s1272] sm:$0xff]
    %v1274 = vlaneseq
    %v1275 = vshrl.u32 %v1274, 7
    %v1276 = vadd.s32 %v1275, 56
    %vm1277 = vcmp.lt.s32.totalorder %v1276, 90
    %v1278 = vsel %vm1277, %v1273, %v12
    %v1279 = vlaneseq
    %v1280 = vand.u32 %v1279, 127
    %v1281 = vadd.s32 %v1280, 256
    %vm1282 = vcmp.lt.s32.totalorder %v1281, 500
    %v1283 = vsel %vm1282, %v1278, %v12
    %s1284 = scalar_lea.vmem [#allocation9], 624
    %s1286 = ssub.s32 256, 1
    %1287 = vst [vmem:[%s1284] sm:%s1286] %v1283
    %s1288 = scalar_lea.vmem %s5, 632
    %v1289 = vld [vmem:[%s1288] sm:$0xff]
    %v1290 = vlaneseq
    %v1291 = vshrl.u32 %v1290, 7
    %v1292 = vadd.s32 %v1291, 56
    %vm1293 = vcmp.lt.s32.totalorder %v1292, 90
    %v1294 = vsel %vm1293, %v1289, %v12
    %v1295 = vlaneseq
    %v1296 = vand.u32 %v1295, 127
    %v1297 = vadd.s32 %v1296, 384
    %vm1298 = vcmp.lt.s32.totalorder %v1297, 500
    %v1299 = vsel %vm1298, %v1294, %v12
    %s1300 = scalar_lea.vmem [#allocation9], 632
    %s1302 = ssub.s32 256, 1
    %1303 = vst [vmem:[%s1300] sm:%s1302] %v1299
    %s1304 = scalar_lea.vmem %s5, 640
    %v1305 = vld [vmem:[%s1304] sm:$0xff]
    %v1306 = vlaneseq
    %v1307 = vshrl.u32 %v1306, 7
    %v1308 = vadd.s32 %v1307, 64
    %vm1309 = vcmp.lt.s32.totalorder %v1308, 90
    %v1310 = vsel %vm1309, %v1305, %v12
    %v1311 = vlaneseq
    %v1312 = vand.u32 %v1311, 127
    %vm1314 = vcmp.lt.s32.totalorder %v1312, 500
    %v1315 = vsel %vm1314, %v1310, %v12
    %s1316 = scalar_lea.vmem [#allocation9], 640
    %s1318 = ssub.s32 256, 1
    %1319 = vst [vmem:[%s1316] sm:%s1318] %v1315
    %s1320 = scalar_lea.vmem %s5, 648
    %v1321 = vld [vmem:[%s1320] sm:$0xff]
    %v1322 = vlaneseq
    %v1323 = vshrl.u32 %v1322, 7
    %v1324 = vadd.s32 %v1323, 64
    %vm1325 = vcmp.lt.s32.totalorder %v1324, 90
    %v1326 = vsel %vm1325, %v1321, %v12
    %v1327 = vlaneseq
    %v1328 = vand.u32 %v1327, 127
    %v1329 = vadd.s32 %v1328, 128
    %vm1330 = vcmp.lt.s32.totalorder %v1329, 500
    %v1331 = vsel %vm1330, %v1326, %v12
    %s1332 = scalar_lea.vmem [#allocation9], 648
    %s1334 = ssub.s32 256, 1
    %1335 = vst [vmem:[%s1332] sm:%s1334] %v1331
    %s1336 = scalar_lea.vmem %s5, 656
    %v1337 = vld [vmem:[%s1336] sm:$0xff]
    %v1338 = vlaneseq
    %v1339 = vshrl.u32 %v1338, 7
    %v1340 = vadd.s32 %v1339, 64
    %vm1341 = vcmp.lt.s32.totalorder %v1340, 90
    %v1342 = vsel %vm1341, %v1337, %v12
    %v1343 = vlaneseq
    %v1344 = vand.u32 %v1343, 127
    %v1345 = vadd.s32 %v1344, 256
    %vm1346 = vcmp.lt.s32.totalorder %v1345, 500
    %v1347 = vsel %vm1346, %v1342, %v12
    %s1348 = scalar_lea.vmem [#allocation9], 656
    %s1350 = ssub.s32 256, 1
    %1351 = vst [vmem:[%s1348] sm:%s1350] %v1347
    %s1352 = scalar_lea.vmem %s5, 664
    %v1353 = vld [vmem:[%s1352] sm:$0xff]
    %v1354 = vlaneseq
    %v1355 = vshrl.u32 %v1354, 7
    %v1356 = vadd.s32 %v1355, 64
    %vm1357 = vcmp.lt.s32.totalorder %v1356, 90
    %v1358 = vsel %vm1357, %v1353, %v12
    %v1359 = vlaneseq
    %v1360 = vand.u32 %v1359, 127
    %v1361 = vadd.s32 %v1360, 384
    %vm1362 = vcmp.lt.s32.totalorder %v1361, 500
    %v1363 = vsel %vm1362, %v1358, %v12
    %s1364 = scalar_lea.vmem [#allocation9], 664
    %s1366 = ssub.s32 256, 1
    %1367 = vst [vmem:[%s1364] sm:%s1366] %v1363
    %s1368 = scalar_lea.vmem %s5, 672
    %v1369 = vld [vmem:[%s1368] sm:$0xff]
    %v1370 = vlaneseq
    %v1371 = vshrl.u32 %v1370, 7
    %v1372 = vadd.s32 %v1371, 72
    %vm1373 = vcmp.lt.s32.totalorder %v1372, 90
    %v1374 = vsel %vm1373, %v1369, %v12
    %v1375 = vlaneseq
    %v1376 = vand.u32 %v1375, 127
    %vm1378 = vcmp.lt.s32.totalorder %v1376, 500
    %v1379 = vsel %vm1378, %v1374, %v12
    %s1380 = scalar_lea.vmem [#allocation9], 672
    %s1382 = ssub.s32 256, 1
    %1383 = vst [vmem:[%s1380] sm:%s1382] %v1379
    %s1384 = scalar_lea.vmem %s5, 680
    %v1385 = vld [vmem:[%s1384] sm:$0xff]
    %v1386 = vlaneseq
    %v1387 = vshrl.u32 %v1386, 7
    %v1388 = vadd.s32 %v1387, 72
    %vm1389 = vcmp.lt.s32.totalorder %v1388, 90
    %v1390 = vsel %vm1389, %v1385, %v12
    %v1391 = vlaneseq
    %v1392 = vand.u32 %v1391, 127
    %v1393 = vadd.s32 %v1392, 128
    %vm1394 = vcmp.lt.s32.totalorder %v1393, 500
    %v1395 = vsel %vm1394, %v1390, %v12
    %s1396 = scalar_lea.vmem [#allocation9], 680
    %s1398 = ssub.s32 256, 1
    %1399 = vst [vmem:[%s1396] sm:%s1398] %v1395
    %s1400 = scalar_lea.vmem %s5, 688
    %v1401 = vld [vmem:[%s1400] sm:$0xff]
    %v1402 = vlaneseq
    %v1403 = vshrl.u32 %v1402, 7
    %v1404 = vadd.s32 %v1403, 72
    %vm1405 = vcmp.lt.s32.totalorder %v1404, 90
    %v1406 = vsel %vm1405, %v1401, %v12
    %v1407 = vlaneseq
    %v1408 = vand.u32 %v1407, 127
    %v1409 = vadd.s32 %v1408, 256
    %vm1410 = vcmp.lt.s32.totalorder %v1409, 500
    %v1411 = vsel %vm1410, %v1406, %v12
    %s1412 = scalar_lea.vmem [#allocation9], 688
    %s1414 = ssub.s32 256, 1
    %1415 = vst [vmem:[%s1412] sm:%s1414] %v1411
    %s1416 = scalar_lea.vmem %s5, 696
    %v1417 = vld [vmem:[%s1416] sm:$0xff]
    %v1418 = vlaneseq
    %v1419 = vshrl.u32 %v1418, 7
    %v1420 = vadd.s32 %v1419, 72
    %vm1421 = vcmp.lt.s32.totalorder %v1420, 90
    %v1422 = vsel %vm1421, %v1417, %v12
    %v1423 = vlaneseq
    %v1424 = vand.u32 %v1423, 127
    %v1425 = vadd.s32 %v1424, 384
    %vm1426 = vcmp.lt.s32.totalorder %v1425, 500
    %v1427 = vsel %vm1426, %v1422, %v12
    %s1428 = scalar_lea.vmem [#allocation9], 696
    %s1430 = ssub.s32 256, 1
    %1431 = vst [vmem:[%s1428] sm:%s1430] %v1427
    %s1432 = scalar_lea.vmem %s5, 704
    %v1433 = vld [vmem:[%s1432] sm:$0xff]
    %v1434 = vlaneseq
    %v1435 = vshrl.u32 %v1434, 7
    %v1436 = vadd.s32 %v1435, 80
    %vm1437 = vcmp.lt.s32.totalorder %v1436, 90
    %v1438 = vsel %vm1437, %v1433, %v12
    %v1439 = vlaneseq
    %v1440 = vand.u32 %v1439, 127
    %vm1442 = vcmp.lt.s32.totalorder %v1440, 500
    %v1443 = vsel %vm1442, %v1438, %v12
    %s1444 = scalar_lea.vmem [#allocation9], 704
    %s1446 = ssub.s32 256, 1
    %1447 = vst [vmem:[%s1444] sm:%s1446] %v1443
    %s1448 = scalar_lea.vmem %s5, 712
    %v1449 = vld [vmem:[%s1448] sm:$0xff]
    %v1450 = vlaneseq
    %v1451 = vshrl.u32 %v1450, 7
    %v1452 = vadd.s32 %v1451, 80
    %vm1453 = vcmp.lt.s32.totalorder %v1452, 90
    %v1454 = vsel %vm1453, %v1449, %v12
    %v1455 = vlaneseq
    %v1456 = vand.u32 %v1455, 127
    %v1457 = vadd.s32 %v1456, 128
    %vm1458 = vcmp.lt.s32.totalorder %v1457, 500
    %v1459 = vsel %vm1458, %v1454, %v12
    %s1460 = scalar_lea.vmem [#allocation9], 712
    %s1462 = ssub.s32 256, 1
    %1463 = vst [vmem:[%s1460] sm:%s1462] %v1459
    %s1464 = scalar_lea.vmem %s5, 720
    %v1465 = vld [vmem:[%s1464] sm:$0xff]
    %v1466 = vlaneseq
    %v1467 = vshrl.u32 %v1466, 7
    %v1468 = vadd.s32 %v1467, 80
    %vm1469 = vcmp.lt.s32.totalorder %v1468, 90
    %v1470 = vsel %vm1469, %v1465, %v12
    %v1471 = vlaneseq
    %v1472 = vand.u32 %v1471, 127
    %v1473 = vadd.s32 %v1472, 256
    %vm1474 = vcmp.lt.s32.totalorder %v1473, 500
    %v1475 = vsel %vm1474, %v1470, %v12
    %s1476 = scalar_lea.vmem [#allocation9], 720
    %s1478 = ssub.s32 256, 1
    %1479 = vst [vmem:[%s1476] sm:%s1478] %v1475
    %s1480 = scalar_lea.vmem %s5, 728
    %v1481 = vld [vmem:[%s1480] sm:$0xff]
    %v1482 = vlaneseq
    %v1483 = vshrl.u32 %v1482, 7
    %v1484 = vadd.s32 %v1483, 80
    %vm1485 = vcmp.lt.s32.totalorder %v1484, 90
    %v1486 = vsel %vm1485, %v1481, %v12
    %v1487 = vlaneseq
    %v1488 = vand.u32 %v1487, 127
    %v1489 = vadd.s32 %v1488, 384
    %vm1490 = vcmp.lt.s32.totalorder %v1489, 500
    %v1491 = vsel %vm1490, %v1486, %v12
    %s1492 = scalar_lea.vmem [#allocation9], 728
    %s1494 = ssub.s32 256, 1
    %1495 = vst [vmem:[%s1492] sm:%s1494] %v1491
    %s1496 = scalar_lea.vmem %s5, 736
    %v1497 = vld [vmem:[%s1496] sm:$0xff]
    %v1498 = vlaneseq
    %v1499 = vshrl.u32 %v1498, 7
    %v1500 = vadd.s32 %v1499, 88
    %vm1501 = vcmp.lt.s32.totalorder %v1500, 90
    %v1502 = vsel %vm1501, %v1497, %v12
    %v1503 = vlaneseq
    %v1504 = vand.u32 %v1503, 127
    %vm1506 = vcmp.lt.s32.totalorder %v1504, 500
    %v1507 = vsel %vm1506, %v1502, %v12
    %s1508 = scalar_lea.vmem [#allocation9], 736
    %s1510 = ssub.s32 256, 1
    %1511 = vst [vmem:[%s1508] sm:%s1510] %v1507
    %s1512 = scalar_lea.vmem %s5, 744
    %v1513 = vld [vmem:[%s1512] sm:$0xff]
    %v1514 = vlaneseq
    %v1515 = vshrl.u32 %v1514, 7
    %v1516 = vadd.s32 %v1515, 88
    %vm1517 = vcmp.lt.s32.totalorder %v1516, 90
    %v1518 = vsel %vm1517, %v1513, %v12
    %v1519 = vlaneseq
    %v1520 = vand.u32 %v1519, 127
    %v1521 = vadd.s32 %v1520, 128
    %vm1522 = vcmp.lt.s32.totalorder %v1521, 500
    %v1523 = vsel %vm1522, %v1518, %v12
    %s1524 = scalar_lea.vmem [#allocation9], 744
    %s1526 = ssub.s32 256, 1
    %1527 = vst [vmem:[%s1524] sm:%s1526] %v1523
    %s1528 = scalar_lea.vmem %s5, 752
    %v1529 = vld [vmem:[%s1528] sm:$0xff]
    %v1530 = vlaneseq
    %v1531 = vshrl.u32 %v1530, 7
    %v1532 = vadd.s32 %v1531, 88
    %vm1533 = vcmp.lt.s32.totalorder %v1532, 90
    %v1534 = vsel %vm1533, %v1529, %v12
    %v1535 = vlaneseq
    %v1536 = vand.u32 %v1535, 127
    %v1537 = vadd.s32 %v1536, 256
    %vm1538 = vcmp.lt.s32.totalorder %v1537, 500
    %v1539 = vsel %vm1538, %v1534, %v12
    %s1540 = scalar_lea.vmem [#allocation9], 752
    %s1542 = ssub.s32 256, 1
    %1543 = vst [vmem:[%s1540] sm:%s1542] %v1539
    %s1544 = scalar_lea.vmem %s5, 760
    %v1545 = vld [vmem:[%s1544] sm:$0xff]
    %v1546 = vlaneseq
    %v1547 = vshrl.u32 %v1546, 7
    %v1548 = vadd.s32 %v1547, 88
    %vm1549 = vcmp.lt.s32.totalorder %v1548, 90
    %v1550 = vsel %vm1549, %v1545, %v12
    %v1551 = vlaneseq
    %v1552 = vand.u32 %v1551, 127
    %v1553 = vadd.s32 %v1552, 384
    %vm1554 = vcmp.lt.s32.totalorder %v1553, 500
    %v1555 = vsel %vm1554, %v1550, %v12
    %s1556 = scalar_lea.vmem [#allocation9], 760
    %s1558 = ssub.s32 256, 1
    %1559 = vst [vmem:[%s1556] sm:%s1558] %v1555
    %v1560 = vld [vmem:[%s0] sm:$0x1f]
    %v1561 = vld [vmem:[#allocation9] sm:$0xff]
    %v1562 = vld [vmem:[#allocation9 + $0x8] sm:$0xff]
    %v1563 = vld [vmem:[#allocation9 + $0x10] sm:$0xff]
    %v1564 = vld [vmem:[#allocation9 + $0x18] sm:$0xff]
    %v1565 = vld [vmem:[#allocation9 + $0x20] sm:$0xff]
    %v1566 = vld [vmem:[#allocation9 + $0x28] sm:$0xff]
    %v1567 = vld [vmem:[#allocation9 + $0x30] sm:$0xff]
    %v1568 = vld [vmem:[#allocation9 + $0x38] sm:$0xff]
    %v1569 = vld [vmem:[#allocation9 + $0x40] sm:$0xff]
    %v1570 = vld [vmem:[#allocation9 + $0x48] sm:$0xff]
    %v1571 = vld [vmem:[#allocation9 + $0x50] sm:$0xff]
    %v1572 = vld [vmem:[#allocation9 + $0x58] sm:$0xff]
    %v1573 = vld [vmem:[#allocation9 + $0x60] sm:$0xff]
    %v1574 = vld [vmem:[#allocation9 + $0x68] sm:$0xff]
    %v1575 = vld [vmem:[#allocation9 + $0x70] sm:$0xff]
    %v1576 = vld [vmem:[#allocation9 + $0x78] sm:$0xff]
    %v1577 = vld [vmem:[#allocation9 + $0x80] sm:$0xff]
    %v1578 = vld [vmem:[#allocation9 + $0x88] sm:$0xff]
    %v1579 = vld [vmem:[#allocation9 + $0x90] sm:$0xff]
    %v1580 = vld [vmem:[#allocation9 + $0x98] sm:$0xff]
    %v1581 = vld [vmem:[#allocation9 + $0xa0] sm:$0xff]
    %v1582 = vld [vmem:[#allocation9 + $0xa8] sm:$0xff]
    %v1583 = vld [vmem:[#allocation9 + $0xb0] sm:$0xff]
    %v1584 = vld [vmem:[#allocation9 + $0xb8] sm:$0xff]
    %v1585 = vld [vmem:[#allocation9 + $0xc0] sm:$0xff]
    %v1586 = vld [vmem:[#allocation9 + $0xc8] sm:$0xff]
    %v1587 = vld [vmem:[#allocation9 + $0xd0] sm:$0xff]
    %v1588 = vld [vmem:[#allocation9 + $0xd8] sm:$0xff]
    %v1589 = vld [vmem:[#allocation9 + $0xe0] sm:$0xff]
    %v1590 = vld [vmem:[#allocation9 + $0xe8] sm:$0xff]
    %v1591 = vld [vmem:[#allocation9 + $0xf0] sm:$0xff]
    %v1592 = vld [vmem:[#allocation9 + $0xf8] sm:$0xff]
    %v1593 = vld [vmem:[#allocation9 + $0x100] sm:$0xff]
    %v1594 = vld [vmem:[#allocation9 + $0x108] sm:$0xff]
    %v1595 = vld [vmem:[#allocation9 + $0x110] sm:$0xff]
    %v1596 = vld [vmem:[#allocation9 + $0x118] sm:$0xff]
    %v1597 = vld [vmem:[#allocation9 + $0x120] sm:$0xff]
    %v1598 = vld [vmem:[#allocation9 + $0x128] sm:$0xff]
    %v1599 = vld [vmem:[#allocation9 + $0x130] sm:$0xff]
    %v1600 = vld [vmem:[#allocation9 + $0x138] sm:$0xff]
    %v1601 = vld [vmem:[#allocation9 + $0x140] sm:$0xff]
    %v1602 = vld [vmem:[#allocation9 + $0x148] sm:$0xff]
    %v1603 = vld [vmem:[#allocation9 + $0x150] sm:$0xff]
    %v1604 = vld [vmem:[#allocation9 + $0x158] sm:$0xff]
    %v1605 = vld [vmem:[#allocation9 + $0x160] sm:$0x7]
    %v1606 = vld [vmem:[#allocation9 + $0x168] sm:$0x7]
    %v1607 = vld [vmem:[#allocation9 + $0x170] sm:$0x7]
    %v1608 = vld [vmem:[#allocation9 + $0x178] sm:$0x7]
    %vm1609 = vcmask 744448
    %v1611 = vsel %vm1609, %v1560, 0
    %vm1613 = vcmask 1042432
    %v1615 = vsel %vm1613, %v1605, 0
    %v1618 = vsel %vm1613, %v1606, 0
    %v1621 = vsel %vm1613, %v1607, 0
    %v1624 = vsel %vm1613, %v1608, 0
    %1626 = vmatpush.msra.mxu0 0.0
    %1627 = vmatpush.msra.mxu0 0.0
    %1628 = vmatpush.msra.mxu0 0.0
    %1629 = vmatpush.msra.mxu0 0.0
    %1630 = vmatpush.msra.mxu0 %v1615
    %1631 = vmatpush.msra.mxu0 %v1601
    %1632 = vmatpush.msra.mxu0 %v1597
    %1633 = vmatpush.msra.mxu0 %v1593
    %1634 = vmatpush.msra.mxu0 %v1589
    %1635 = vmatpush.msra.mxu0 %v1585
    %1636 = vmatpush.msra.mxu0 %v1581
    %1637 = vmatpush.msra.mxu0 %v1577
    %1638 = vmatpush.msra.mxu0 %v1573
    %1639 = vmatpush.msra.mxu0 %v1569
    %1640 = vmatpush.msra.mxu0 %v1565
    %1641 = vmatpush.msra.mxu0 %v1561
    %1642 = vmatmul.f32.gmra.mxu0 %v1611
    %v1643 = vpop.f32.mrf.mxu0
    %v1644 = vadd.f32 0.0, %v1643
    %1645 = vdwg.mxu0
    %1646 = vmatpush.msra.mxu0 0.0
    %1647 = vmatpush.msra.mxu0 0.0
    %1648 = vmatpush.msra.mxu0 0.0
    %1649 = vmatpush.msra.mxu0 0.0
    %1650 = vmatpush.msra.mxu0 %v1618
    %1651 = vmatpush.msra.mxu0 %v1602
    %1652 = vmatpush.msra.mxu0 %v1598
    %1653 = vmatpush.msra.mxu0 %v1594
    %1654 = vmatpush.msra.mxu0 %v1590
    %1655 = vmatpush.msra.mxu0 %v1586
    %1656 = vmatpush.msra.mxu0 %v1582
    %1657 = vmatpush.msra.mxu0 %v1578
    %1658 = vmatpush.msra.mxu0 %v1574
    %1659 = vmatpush.msra.mxu0 %v1570
    %1660 = vmatpush.msra.mxu0 %v1566
    %1661 = vmatpush.msra.mxu0 %v1562
    %1662 = vmatmul.f32.gmra.mxu0 %v1611
    %v1663 = vpop.f32.mrf.mxu0
    %v1664 = vadd.f32 0.0, %v1663
    %1665 = vdwg.mxu0
    %1666 = vmatpush.msra.mxu0 0.0
    %1667 = vmatpush.msra.mxu0 0.0
    %1668 = vmatpush.msra.mxu0 0.0
    %1669 = vmatpush.msra.mxu0 0.0
    %1670 = vmatpush.msra.mxu0 %v1621
    %1671 = vmatpush.msra.mxu0 %v1603
    %1672 = vmatpush.msra.mxu0 %v1599
    %1673 = vmatpush.msra.mxu0 %v1595
    %1674 = vmatpush.msra.mxu0 %v1591
    %1675 = vmatpush.msra.mxu0 %v1587
    %1676 = vmatpush.msra.mxu0 %v1583
    %1677 = vmatpush.msra.mxu0 %v1579
    %1678 = vmatpush.msra.mxu0 %v1575
    %1679 = vmatpush.msra.mxu0 %v1571
    %1680 = vmatpush.msra.mxu0 %v1567
    %1681 = vmatpush.msra.mxu0 %v1563
    %1682 = vmatmul.f32.gmra.mxu0 %v1611
    %v1683 = vpop.f32.mrf.mxu0
    %v1684 = vadd.f32 0.0, %v1683
    %1685 = vdwg.mxu0
    %1686 = vmatpush.msra.mxu0 0.0
    %1687 = vmatpush.msra.mxu0 0.0
    %1688 = vmatpush.msra.mxu0 0.0
    %1689 = vmatpush.msra.mxu0 0.0
    %1690 = vmatpush.msra.mxu0 %v1624
    %1691 = vmatpush.msra.mxu0 %v1604
    %1692 = vmatpush.msra.mxu0 %v1600
    %1693 = vmatpush.msra.mxu0 %v1596
    %1694 = vmatpush.msra.mxu0 %v1592
    %1695 = vmatpush.msra.mxu0 %v1588
    %1696 = vmatpush.msra.mxu0 %v1584
    %1697 = vmatpush.msra.mxu0 %v1580
    %1698 = vmatpush.msra.mxu0 %v1576
    %1699 = vmatpush.msra.mxu0 %v1572
    %1700 = vmatpush.msra.mxu0 %v1568
    %1701 = vmatpush.msra.mxu0 %v1564
    %1702 = vmatmul.f32.gmra.mxu0 %v1611
    %v1703 = vpop.f32.mrf.mxu0
    %v1704 = vadd.f32 0.0, %v1703
    %1705 = vdwg.mxu0
    %v1706 = vmax.f32 %v1644, 0.0
    %v1707 = vmax.f32 %v1664, 0.0
    %v1708 = vmax.f32 %v1684, 0.0
    %v1709 = vmax.f32 %v1704, 0.0
    %vm1710 = vcmask 1044480
    %v1711 = vsel %vm1710, %v1706, -inf
    %v1712 = vrot.slane %v1711, 4
    %v1713 = vmax.f32 %v1711, %v1712
    %v1714 = vrot.slane %v1713, 2
    %v1715 = vmax.f32 %v1713, %v1714
    %v1716 = vrot.slane %v1715, 1
    %v1717 = vmax.f32 %v1715, %v1716
    %v1718 = vsel %vm1710, %v1707, -inf
    %v1719 = vrot.slane %v1718, 4
    %v1720 = vmax.f32 %v1718, %v1719
    %v1721 = vrot.slane %v1720, 2
    %v1722 = vmax.f32 %v1720, %v1721
    %v1723 = vrot.slane %v1722, 1
    %v1724 = vmax.f32 %v1722, %v1723
    %v1725 = vsel %vm1710, %v1708, -inf
    %v1726 = vrot.slane %v1725, 4
    %v1727 = vmax.f32 %v1725, %v1726
    %v1728 = vrot.slane %v1727, 2
    %v1729 = vmax.f32 %v1727, %v1728
    %v1730 = vrot.slane %v1729, 1
    %v1731 = vmax.f32 %v1729, %v1730
    %vm1732 = vcmask 946176
    %v1733 = vsel %vm1732, %v1709, -inf
    %v1734 = vrot.slane %v1733, 4
    %v1735 = vmax.f32 %v1733, %v1734
    %v1736 = vrot.slane %v1735, 2
    %v1737 = vmax.f32 %v1735, %v1736
    %v1738 = vrot.slane %v1737, 1
    %v1739 = vmax.f32 %v1737, %v1738
    %s1740 = scalar_lea.vmem [#allocation9], 384
    %v1741 = vld [vmem:[%s1740] sm:$0xff]
    %v1742 = vld [vmem:[%s1740 + $0x8] sm:$0xff]
    %v1743 = vld [vmem:[%s1740 + $0x10] sm:$0xff]
    %v1744 = vld [vmem:[%s1740 + $0x18] sm:$0xff]
    %v1745 = vld [vmem:[%s1740 + $0x20] sm:$0xff]
    %v1746 = vld [vmem:[%s1740 + $0x28] sm:$0xff]
    %v1747 = vld [vmem:[%s1740 + $0x30] sm:$0xff]
    %v1748 = vld [vmem:[%s1740 + $0x38] sm:$0xff]
    %v1749 = vld [vmem:[%s1740 + $0x40] sm:$0xff]
    %v1750 = vld [vmem:[%s1740 + $0x48] sm:$0xff]
    %v1751 = vld [vmem:[%s1740 + $0x50] sm:$0xff]
    %v1752 = vld [vmem:[%s1740 + $0x58] sm:$0xff]
    %v1753 = vld [vmem:[%s1740 + $0x60] sm:$0xff]
    %v1754 = vld [vmem:[%s1740 + $0x68] sm:$0xff]
    %v1755 = vld [vmem:[%s1740 + $0x70] sm:$0xff]
    %v1756 = vld [vmem:[%s1740 + $0x78] sm:$0xff]
    %v1757 = vld [vmem:[%s1740 + $0x80] sm:$0xff]
    %v1758 = vld [vmem:[%s1740 + $0x88] sm:$0xff]
    %v1759 = vld [vmem:[%s1740 + $0x90] sm:$0xff]
    %v1760 = vld [vmem:[%s1740 + $0x98] sm:$0xff]
    %v1761 = vld [vmem:[%s1740 + $0xa0] sm:$0xff]
    %v1762 = vld [vmem:[%s1740 + $0xa8] sm:$0xff]
    %v1763 = vld [vmem:[%s1740 + $0xb0] sm:$0xff]
    %v1764 = vld [vmem:[%s1740 + $0xb8] sm:$0xff]
    %v1765 = vld [vmem:[%s1740 + $0xc0] sm:$0xff]
    %v1766 = vld [vmem:[%s1740 + $0xc8] sm:$0xff]
    %v1767 = vld [vmem:[%s1740 + $0xd0] sm:$0xff]
    %v1768 = vld [vmem:[%s1740 + $0xd8] sm:$0xff]
    %v1769 = vld [vmem:[%s1740 + $0xe0] sm:$0xff]
    %v1770 = vld [vmem:[%s1740 + $0xe8] sm:$0xff]
    %v1771 = vld [vmem:[%s1740 + $0xf0] sm:$0xff]
    %v1772 = vld [vmem:[%s1740 + $0xf8] sm:$0xff]
    %v1773 = vld [vmem:[%s1740 + $0x100] sm:$0xff]
    %v1774 = vld [vmem:[%s1740 + $0x108] sm:$0xff]
    %v1775 = vld [vmem:[%s1740 + $0x110] sm:$0xff]
    %v1776 = vld [vmem:[%s1740 + $0x118] sm:$0xff]
    %v1777 = vld [vmem:[%s1740 + $0x120] sm:$0xff]
    %v1778 = vld [vmem:[%s1740 + $0x128] sm:$0xff]
    %v1779 = vld [vmem:[%s1740 + $0x130] sm:$0xff]
    %v1780 = vld [vmem:[%s1740 + $0x138] sm:$0xff]
    %v1781 = vld [vmem:[%s1740 + $0x140] sm:$0xff]
    %v1782 = vld [vmem:[%s1740 + $0x148] sm:$0xff]
    %v1783 = vld [vmem:[%s1740 + $0x150] sm:$0xff]
    %v1784 = vld [vmem:[%s1740 + $0x158] sm:$0xff]
    %v1785 = vld [vmem:[%s1740 + $0x160] sm:$0x7]
    %v1786 = vld [vmem:[%s1740 + $0x168] sm:$0x7]
    %v1787 = vld [vmem:[%s1740 + $0x170] sm:$0x7]
    %v1788 = vld [vmem:[%s1740 + $0x178] sm:$0x7]
    %v1790 = vsel %vm1613, %v1785, 0
    %v1793 = vsel %vm1613, %v1786, 0
    %v1796 = vsel %vm1613, %v1787, 0
    %v1799 = vsel %vm1613, %v1788, 0
    %1801 = vmatpush.msra.mxu0 0.0
    %1802 = vmatpush.msra.mxu0 0.0
    %1803 = vmatpush.msra.mxu0 0.0
    %1804 = vmatpush.msra.mxu0 0.0
    %1805 = vmatpush.msra.mxu0 %v1790
    %1806 = vmatpush.msra.mxu0 %v1781
    %1807 = vmatpush.msra.mxu0 %v1777
    %1808 = vmatpush.msra.mxu0 %v1773
    %1809 = vmatpush.msra.mxu0 %v1769
    %1810 = vmatpush.msra.mxu0 %v1765
    %1811 = vmatpush.msra.mxu0 %v1761
    %1812 = vmatpush.msra.mxu0 %v1757
    %1813 = vmatpush.msra.mxu0 %v1753
    %1814 = vmatpush.msra.mxu0 %v1749
    %1815 = vmatpush.msra.mxu0 %v1745
    %1816 = vmatpush.msra.mxu0 %v1741
    %1817 = vmatmul.f32.gmra.mxu0 %v1611
    %v1818 = vpop.f32.mrf.mxu0
    %v1819 = vadd.f32 0.0, %v1818
    %1820 = vdwg.mxu0
    %1821 = vmatpush.msra.mxu0 0.0
    %1822 = vmatpush.msra.mxu0 0.0
    %1823 = vmatpush.msra.mxu0 0.0
    %1824 = vmatpush.msra.mxu0 0.0
    %1825 = vmatpush.msra.mxu0 %v1793
    %1826 = vmatpush.msra.mxu0 %v1782
    %1827 = vmatpush.msra.mxu0 %v1778
    %1828 = vmatpush.msra.mxu0 %v1774
    %1829 = vmatpush.msra.mxu0 %v1770
    %1830 = vmatpush.msra.mxu0 %v1766
    %1831 = vmatpush.msra.mxu0 %v1762
    %1832 = vmatpush.msra.mxu0 %v1758
    %1833 = vmatpush.msra.mxu0 %v1754
    %1834 = vmatpush.msra.mxu0 %v1750
    %1835 = vmatpush.msra.mxu0 %v1746
    %1836 = vmatpush.msra.mxu0 %v1742
    %1837 = vmatmul.f32.gmra.mxu0 %v1611
    %v1838 = vpop.f32.mrf.mxu0
    %v1839 = vadd.f32 0.0, %v1838
    %1840 = vdwg.mxu0
    %1841 = vmatpush.msra.mxu0 0.0
    %1842 = vmatpush.msra.mxu0 0.0
    %1843 = vmatpush.msra.mxu0 0.0
    %1844 = vmatpush.msra.mxu0 0.0
    %1845 = vmatpush.msra.mxu0 %v1796
    %1846 = vmatpush.msra.mxu0 %v1783
    %1847 = vmatpush.msra.mxu0 %v1779
    %1848 = vmatpush.msra.mxu0 %v1775
    %1849 = vmatpush.msra.mxu0 %v1771
    %1850 = vmatpush.msra.mxu0 %v1767
    %1851 = vmatpush.msra.mxu0 %v1763
    %1852 = vmatpush.msra.mxu0 %v1759
    %1853 = vmatpush.msra.mxu0 %v1755
    %1854 = vmatpush.msra.mxu0 %v1751
    %1855 = vmatpush.msra.mxu0 %v1747
    %1856 = vmatpush.msra.mxu0 %v1743
    %1857 = vmatmul.f32.gmra.mxu0 %v1611
    %v1858 = vpop.f32.mrf.mxu0
    %v1859 = vadd.f32 0.0, %v1858
    %1860 = vdwg.mxu0
    %1861 = vmatpush.msra.mxu0 0.0
    %1862 = vmatpush.msra.mxu0 0.0
    %1863 = vmatpush.msra.mxu0 0.0
    %1864 = vmatpush.msra.mxu0 0.0
    %1865 = vmatpush.msra.mxu0 %v1799
    %1866 = vmatpush.msra.mxu0 %v1784
    %1867 = vmatpush.msra.mxu0 %v1780
    %1868 = vmatpush.msra.mxu0 %v1776
    %1869 = vmatpush.msra.mxu0 %v1772
    %1870 = vmatpush.msra.mxu0 %v1768
    %1871 = vmatpush.msra.mxu0 %v1764
    %1872 = vmatpush.msra.mxu0 %v1760
    %1873 = vmatpush.msra.mxu0 %v1756
    %1874 = vmatpush.msra.mxu0 %v1752
    %1875 = vmatpush.msra.mxu0 %v1748
    %1876 = vmatpush.msra.mxu0 %v1744
    %1877 = vmatmul.f32.gmra.mxu0 %v1611
    %v1878 = vpop.f32.mrf.mxu0
    %v1879 = vadd.f32 0.0, %v1878
    %1880 = vdwg.mxu0
    %v1881 = vmax.f32 %v1819, 0.0
    %v1882 = vmax.f32 %v1839, 0.0
    %v1883 = vmax.f32 %v1859, 0.0
    %v1884 = vmax.f32 %v1879, 0.0
    %v1885 = vsel %vm1710, %v1881, -inf
    %v1886 = vrot.slane %v1885, 4
    %v1887 = vmax.f32 %v1885, %v1886
    %v1888 = vrot.slane %v1887, 2
    %v1889 = vmax.f32 %v1887, %v1888
    %v1890 = vrot.slane %v1889, 1
    %v1891 = vmax.f32 %v1889, %v1890
    %v1892 = vsel %vm1710, %v1882, -inf
    %v1893 = vrot.slane %v1892, 4
    %v1894 = vmax.f32 %v1892, %v1893
    %v1895 = vrot.slane %v1894, 2
    %v1896 = vmax.f32 %v1894, %v1895
    %v1897 = vrot.slane %v1896, 1
    %v1898 = vmax.f32 %v1896, %v1897
    %v1899 = vsel %vm1710, %v1883, -inf
    %v1900 = vrot.slane %v1899, 4
    %v1901 = vmax.f32 %v1899, %v1900
    %v1902 = vrot.slane %v1901, 2
    %v1903 = vmax.f32 %v1901, %v1902
    %v1904 = vrot.slane %v1903, 1
    %v1905 = vmax.f32 %v1903, %v1904
    %v1906 = vsel %vm1732, %v1884, -inf
    %v1907 = vrot.slane %v1906, 4
    %v1908 = vmax.f32 %v1906, %v1907
    %v1909 = vrot.slane %v1908, 2
    %v1910 = vmax.f32 %v1908, %v1909
    %v1911 = vrot.slane %v1910, 1
    %v1912 = vmax.f32 %v1910, %v1911
    %vm1913 = vcmask 1040384
    %v1914 = vsel %vm1913, %v1717, %v1891
    %v1915 = vsel %vm1913, %v1724, %v1898
    %v1916 = vsel %vm1913, %v1731, %v1905
    %v1917 = vsel %vm1913, %v1739, %v1912
    %v1918 = vld [vmem:[%s1] sm:$0xff]
    %v1919 = vld [vmem:[%s1 + $0x8] sm:$0xff]
    %v1920 = vld [vmem:[%s1 + $0x10] sm:$0xff]
    %v1921 = vld [vmem:[%s1 + $0x18] sm:$0xff]
    %v1922 = vld [vmem:[%s1 + $0x20] sm:$0xff]
    %v1923 = vld [vmem:[%s1 + $0x28] sm:$0xff]
    %v1924 = vld [vmem:[%s1 + $0x30] sm:$0xff]
    %v1925 = vld [vmem:[%s1 + $0x38] sm:$0xff]
    %v1926 = vld [vmem:[%s1 + $0x40] sm:$0xff]
    %v1927 = vld [vmem:[%s1 + $0x48] sm:$0xff]
    %v1928 = vld [vmem:[%s1 + $0x50] sm:$0xff]
    %v1929 = vld [vmem:[%s1 + $0x58] sm:$0xff]
    %v1930 = vld [vmem:[%s1 + $0x60] sm:$0xff]
    %v1931 = vld [vmem:[%s1 + $0x68] sm:$0xff]
    %v1932 = vld [vmem:[%s1 + $0x70] sm:$0xff]
    %v1933 = vld [vmem:[%s1 + $0x78] sm:$0xff]
    %v1934 = vld [vmem:[%s1 + $0x80] sm:$0xff]
    %v1935 = vld [vmem:[%s1 + $0x88] sm:$0xff]
    %v1936 = vld [vmem:[%s1 + $0x90] sm:$0xff]
    %v1937 = vld [vmem:[%s1 + $0x98] sm:$0xff]
    %v1938 = vld [vmem:[%s1 + $0xa0] sm:$0xff]
    %v1939 = vld [vmem:[%s1 + $0xa8] sm:$0xff]
    %v1940 = vld [vmem:[%s1 + $0xb0] sm:$0xff]
    %v1941 = vld [vmem:[%s1 + $0xb8] sm:$0xff]
    %v1942 = vld [vmem:[%s1 + $0xc0] sm:$0xff]
    %v1943 = vld [vmem:[%s1 + $0xc8] sm:$0xff]
    %v1944 = vld [vmem:[%s1 + $0xd0] sm:$0xff]
    %v1945 = vld [vmem:[%s1 + $0xd8] sm:$0xff]
    %v1946 = vld [vmem:[%s1 + $0xe0] sm:$0xff]
    %v1947 = vld [vmem:[%s1 + $0xe8] sm:$0xff]
    %v1948 = vld [vmem:[%s1 + $0xf0] sm:$0xff]
    %v1949 = vld [vmem:[%s1 + $0xf8] sm:$0xff]
    %v1950 = vld [vmem:[%s1 + $0x100] sm:$0xff]
    %v1951 = vld [vmem:[%s1 + $0x108] sm:$0xff]
    %v1952 = vld [vmem:[%s1 + $0x110] sm:$0xff]
    %v1953 = vld [vmem:[%s1 + $0x118] sm:$0xff]
    %v1954 = vld [vmem:[%s1 + $0x120] sm:$0xff]
    %v1955 = vld [vmem:[%s1 + $0x128] sm:$0xff]
    %v1956 = vld [vmem:[%s1 + $0x130] sm:$0xff]
    %v1957 = vld [vmem:[%s1 + $0x138] sm:$0xff]
    %v1958 = vld [vmem:[%s1 + $0x140] sm:$0xff]
    %v1959 = vld [vmem:[%s1 + $0x148] sm:$0xff]
    %v1960 = vld [vmem:[%s1 + $0x150] sm:$0xff]
    %v1961 = vld [vmem:[%s1 + $0x158] sm:$0xff]
    %v1962 = vld [vmem:[%s1 + $0x160] sm:$0xff]
    %v1963 = vld [vmem:[%s1 + $0x168] sm:$0xff]
    %v1964 = vld [vmem:[%s1 + $0x170] sm:$0xff]
    %v1965 = vld [vmem:[%s1 + $0x178] sm:$0xff]
    %v1966 = vld [vmem:[%s1 + $0x180] sm:$0xff]
    %v1967 = vld [vmem:[%s1 + $0x188] sm:$0xff]
    %v1968 = vld [vmem:[%s1 + $0x190] sm:$0xff]
    %v1969 = vld [vmem:[%s1 + $0x198] sm:$0xff]
    %v1970 = vld [vmem:[%s1 + $0x1a0] sm:$0xff]
    %v1971 = vld [vmem:[%s1 + $0x1a8] sm:$0xff]
    %v1972 = vld [vmem:[%s1 + $0x1b0] sm:$0xff]
    %v1973 = vld [vmem:[%s1 + $0x1b8] sm:$0xff]
    %v1974 = vld [vmem:[%s1 + $0x1c0] sm:$0xff]
    %v1975 = vld [vmem:[%s1 + $0x1c8] sm:$0xff]
    %v1976 = vld [vmem:[%s1 + $0x1d0] sm:$0xff]
    %v1977 = vld [vmem:[%s1 + $0x1d8] sm:$0xff]
    %v1978 = vld [vmem:[%s1 + $0x1e0] sm:$0xff]
    %v1979 = vld [vmem:[%s1 + $0x1e8] sm:$0xff]
    %v1980 = vld [vmem:[%s1 + $0x1f0] sm:$0xf]
    %v1981 = vld [vmem:[%s2] sm:$0x1]
    %v1983 = vperm.slane %v1981, 0
    %vm1985 = vcmask 949248
    %v1987 = vsel %vm1985, %v1917, 0
    %vm1989 = vcmask 1043456
    %v1991 = vsel %vm1989, %v1980, 0
    %1993 = vmatpush.msra.mxu0 %v1933
    %1994 = vmatpush.msra.mxu0 %v1932
    %1995 = vmatpush.msra.mxu0 %v1931
    %1996 = vmatpush.msra.mxu0 %v1930
    %1997 = vmatpush.msra.mxu0 %v1929
    %1998 = vmatpush.msra.mxu0 %v1928
    %1999 = vmatpush.msra.mxu0 %v1927
    %2000 = vmatpush.msra.mxu0 %v1926
    %2001 = vmatpush.msra.mxu0 %v1925
    %2002 = vmatpush.msra.mxu0 %v1924
    %2003 = vmatpush.msra.mxu0 %v1923
    %2004 = vmatpush.msra.mxu0 %v1922
    %2005 = vmatpush.msra.mxu0 %v1921
    %2006 = vmatpush.msra.mxu0 %v1920
    %2007 = vmatpush.msra.mxu0 %v1919
    %2008 = vmatpush.msra.mxu0 %v1918
    %2009 = vmatmul.f32.gmra.mxu0 %v1914
    %v2010 = vpop.f32.mrf.mxu0
    %v2011 = vadd.f32 %v1983, %v2010
    %2012 = vdwg.mxu0
    %2013 = vmatpush.msra.mxu0 %v1949
    %2014 = vmatpush.msra.mxu0 %v1948
    %2015 = vmatpush.msra.mxu0 %v1947
    %2016 = vmatpush.msra.mxu0 %v1946
    %2017 = vmatpush.msra.mxu0 %v1945
    %2018 = vmatpush.msra.mxu0 %v1944
    %2019 = vmatpush.msra.mxu0 %v1943
    %2020 = vmatpush.msra.mxu0 %v1942
    %2021 = vmatpush.msra.mxu0 %v1941
    %2022 = vmatpush.msra.mxu0 %v1940
    %2023 = vmatpush.msra.mxu0 %v1939
    %2024 = vmatpush.msra.mxu0 %v1938
    %2025 = vmatpush.msra.mxu0 %v1937
    %2026 = vmatpush.msra.mxu0 %v1936
    %2027 = vmatpush.msra.mxu0 %v1935
    %2028 = vmatpush.msra.mxu0 %v1934
    %2029 = vmatmul.f32.gmra.mxu0 %v1915
    %v2030 = vpop.f32.mrf.mxu0
    %v2031 = vadd.f32 %v2011, %v2030
    %2032 = vdwg.mxu0
    %2033 = vmatpush.msra.mxu0 %v1965
    %2034 = vmatpush.msra.mxu0 %v1964
    %2035 = vmatpush.msra.mxu0 %v1963
    %2036 = vmatpush.msra.mxu0 %v1962
    %2037 = vmatpush.msra.mxu0 %v1961
    %2038 = vmatpush.msra.mxu0 %v1960
    %2039 = vmatpush.msra.mxu0 %v1959
    %2040 = vmatpush.msra.mxu0 %v1958
    %2041 = vmatpush.msra.mxu0 %v1957
    %2042 = vmatpush.msra.mxu0 %v1956
    %2043 = vmatpush.msra.mxu0 %v1955
    %2044 = vmatpush.msra.mxu0 %v1954
    %2045 = vmatpush.msra.mxu0 %v1953
    %2046 = vmatpush.msra.mxu0 %v1952
    %2047 = vmatpush.msra.mxu0 %v1951
    %2048 = vmatpush.msra.mxu0 %v1950
    %2049 = vmatmul.f32.gmra.mxu0 %v1916
    %v2050 = vpop.f32.mrf.mxu0
    %v2051 = vadd.f32 %v2031, %v2050
    %2052 = vdwg.mxu0
    %2053 = vmatpush.msra.mxu0 0.0
    %2054 = vmatpush.msra.mxu0 %v1991
    %2055 = vmatpush.msra.mxu0 %v1979
    %2056 = vmatpush.msra.mxu0 %v1978
    %2057 = vmatpush.msra.mxu0 %v1977
    %2058 = vmatpush.msra.mxu0 %v1976
    %2059 = vmatpush.msra.mxu0 %v1975
    %2060 = vmatpush.msra.mxu0 %v1974
    %2061 = vmatpush.msra.mxu0 %v1973
    %2062 = vmatpush.msra.mxu0 %v1972
    %2063 = vmatpush.msra.mxu0 %v1971
    %2064 = vmatpush.msra.mxu0 %v1970
    %2065 = vmatpush.msra.mxu0 %v1969
    %2066 = vmatpush.msra.mxu0 %v1968
    %2067 = vmatpush.msra.mxu0 %v1967
    %2068 = vmatpush.msra.mxu0 %v1966
    %2069 = vmatmul.f32.gmra.mxu0 %v1987
    %v2070 = vpop.f32.mrf.mxu0
    %v2071 = vadd.f32 %v2051, %v2070
    %2072 = vdwg.mxu0
    %v2073 = vmax.f32 %v2071, 0.0
    %v2074 = vld [vmem:[%s3] sm:$0xff]
    %v2075 = vld [vmem:[%s3 + $0x8] sm:$0xff]
    %v2076 = vld [vmem:[%s3 + $0x10] sm:$0xff]
    %v2077 = vld [vmem:[%s3 + $0x18] sm:$0xff]
    %v2078 = vld [vmem:[%s3 + $0x20] sm:$0xff]
    %v2079 = vld [vmem:[%s3 + $0x28] sm:$0xff]
    %v2080 = vld [vmem:[%s3 + $0x30] sm:$0xff]
    %v2081 = vld [vmem:[%s3 + $0x38] sm:$0xff]
    %v2082 = vld [vmem:[%s3 + $0x40] sm:$0xff]
    %v2083 = vld [vmem:[%s3 + $0x48] sm:$0xff]
    %v2084 = vld [vmem:[%s3 + $0x50] sm:$0xff]
    %v2085 = vld [vmem:[%s3 + $0x58] sm:$0xff]
    %v2086 = vld [vmem:[%s3 + $0x60] sm:$0xff]
    %v2087 = vld [vmem:[%s3 + $0x68] sm:$0xff]
    %v2088 = vld [vmem:[%s3 + $0x70] sm:$0xff]
    %v2089 = vld [vmem:[%s3 + $0x78] sm:$0x1f]
    %v2090 = vld [vmem:[%s4] sm:$0x1]
    %v2092 = vperm.slane %v2090, 0
    %vm2094 = vcmask 1022976
    %v2096 = vsel %vm2094, %v2073, 0
    %v2099 = vsel %vm1710, %v2089, 0
    %2101 = vmatpush.msra.mxu0 %v2099
    %2102 = vmatpush.msra.mxu0 %v2088
    %2103 = vmatpush.msra.mxu0 %v2087
    %2104 = vmatpush.msra.mxu0 %v2086
    %2105 = vmatpush.msra.mxu0 %v2085
    %2106 = vmatpush.msra.mxu0 %v2084
    %2107 = vmatpush.msra.mxu0 %v2083
    %2108 = vmatpush.msra.mxu0 %v2082
    %2109 = vmatpush.msra.mxu0 %v2081
    %2110 = vmatpush.msra.mxu0 %v2080
    %2111 = vmatpush.msra.mxu0 %v2079
    %2112 = vmatpush.msra.mxu0 %v2078
    %2113 = vmatpush.msra.mxu0 %v2077
    %2114 = vmatpush.msra.mxu0 %v2076
    %2115 = vmatpush.msra.mxu0 %v2075
    %2116 = vmatpush.msra.mxu0 %v2074
    %2117 = vmatmul.f32.gmra.mxu0 %v2096
    %v2118 = vpop.f32.mrf.mxu0
    %v2119 = vadd.f32 %v2092, %v2118
    %2120 = vdwg.mxu0
    %v2121 = vmax.f32 %v2119, 0.0
    %vm2122 = vcmask 246784
    %v2123 = vsel %vm2122, %v2121, -inf
    %2124 = vmax.xlane.f32.xlu0 %v2123
    %v2125 = vpop.xlane.xlu0 %2124
    %v2126 = vsub.f32 %v2121, %v2125
    %v2127 = vmul.f32 %v2126, 1.442695
    %v2128 = vpow.pop %v2127
    %v2129 = vsel %vm2122, %v2128, 0.0
    %2130 = vadd.xlane.f32.xlu0 %v2129
    %v2131 = vpop.xlane.xlu0 %2130
    %v2132 = vrcp.pop %v2131
    %v2133 = vmul.f32 %v2131, %v2132
    %v2134 = vsub.f32 2.0, %v2133
    %v2135 = vmul.f32 %v2132, %v2134
    %v2136 = vmul.f32 %v2128, %v2135
    %2137 = vst.msk [vmem:[#allocation7] sm:$0x3] %vm2122, %v2136
    // Predicated region
    $region26: #{listenet_forward.2} parent=1 // pred_check
      _
    $region27: #{listenet_forward.2} parent=1 // pred_check_branch
      %2139 = sbr.rel (0) target = $region29
    $region28: #{listenet_forward.2} parent=1 // pred_region
      %2141 = vsyncadd [#allocation8], 0
      %s2143 = sshll.u32 [#allocation7], 4
      %s2144 = int_to_ptr.vmem [resolvable:$true] %s2143
      %s2145 = sshll.u32 %s7, 4
      %s2146 = int_to_ptr.hbm [resolvable:$true] %s2145
      %2148 = dma.vmem_to_hbm [thread:$0]  %s2144, 32, %s2146, [#allocation8]
    $region29: #{listenet_forward.2} parent=1 // pred_fallthru
      _
    // Predicated region
    $region30: #{listenet_forward.2} parent=1 // pred_check
      _
    $region31: #{listenet_forward.2} parent=1 // pred_check_branch
      %2150 = sbr.rel (0) target = $region33
    $region32: #{listenet_forward.2} parent=1 // pred_region
      %2152 = dma.done [#allocation8], 32
    $region33: #{listenet_forward.2} parent=1 // pred_fallthru
      _
    %2153 = vsyncpa [#allocation8], 1

</llo_original>
